<compile_context>
chip_gen: v5e
topology: v5e:2x2
jax: 0.10.0
libtpu: 0.0.40
codegen_flags: <defaults>
</compile_context>

<pallas_src>
import math

import jax
import jax.numpy as jnp
from jax.experimental import pallas as pl
from jax.experimental.pallas import tpu as pltpu

# ---- model config (small, consistent with the module's __init__ signature) ----
D_MODEL = 32
N_HEADS = 4
D_K = D_MODEL // N_HEADS
D_FF = 64
EPS = 1e-6
NEG_INF = -1000000000.0


# ---------------------------------------------------------------------------
# in-kernel helpers
# ---------------------------------------------------------------------------
def _layernorm_k(x, alpha, bias):
    # Matches torch LayerNormalization: mean / unbiased std over last dim,
    # denominator (std + eps).  EUP approx reciprocal for the divide.
    n = x.shape[-1]
    mean = jnp.mean(x, axis=-1, keepdims=True)
    var = jnp.sum((x - mean) ** 2, axis=-1, keepdims=True) * (1.0 / (n - 1))
    std = jnp.sqrt(var)
    inv = pl.reciprocal(std + EPS, approx=True)
    return alpha * (x - mean) * inv + bias


def _attend_k(q, k, v, wo, bias):
    # q: (B*Sq, D) flat; k, v: (B*Sk, D) flat; wo: (D, D);
    # bias: (B, Sq, Sk) additive float mask (0 attend / -1e9 masked).
    # NOTE: the 1/sqrt(d_k) scale is already folded into Wq at pack time.
    B, Sq, Sk = bias.shape
    qb = q.reshape(B, Sq, D_MODEL)
    kb = k.reshape(B, Sk, D_MODEL)
    vb = v.reshape(B, Sk, D_MODEL)
    heads = []
    for h in range(N_HEADS):                      # static, unrolled (H = 4)
        lo = h * D_K
        s = jnp.einsum('bqd,bkd->bqk', qb[..., lo:lo + D_K], kb[..., lo:lo + D_K],
                       preferred_element_type=jnp.float32) + bias
        s = s - jnp.max(s, axis=-1, keepdims=True)
        e = jnp.exp(s)
        p = e * pl.reciprocal(jnp.sum(e, axis=-1, keepdims=True), approx=True)
        heads.append(jnp.einsum('bqk,bkd->bqd', p, vb[..., lo:lo + D_K],
                                preferred_element_type=jnp.float32))
    ctx = jnp.concatenate(heads, axis=-1).reshape(B * Sq, D_MODEL)
    return jnp.dot(ctx, wo, preferred_element_type=jnp.float32)


def _self_attn_k(x, w, bias):
    # w: (D, 4D) = [Wq(scaled) | Wk | Wv | Wo]; single packed QKV matmul.
    qkv = jnp.dot(x, w[:, :3 * D_MODEL], preferred_element_type=jnp.float32)
    return _attend_k(qkv[:, :D_MODEL], qkv[:, D_MODEL:2 * D_MODEL],
                     qkv[:, 2 * D_MODEL:3 * D_MODEL], w[:, 3 * D_MODEL:], bias)


def _cross_attn_k(x, enc, w, bias):
    q = jnp.dot(x, w[:, :D_MODEL], preferred_element_type=jnp.float32)
    kv = jnp.dot(enc, w[:, D_MODEL:3 * D_MODEL],
                 preferred_element_type=jnp.float32)
    return _attend_k(q, kv[:, :D_MODEL], kv[:, D_MODEL:],
                     w[:, 3 * D_MODEL:], bias)


# ---------------------------------------------------------------------------
# fused decoder-stack kernel: grid = (layer,)
# ---------------------------------------------------------------------------
def decoder_stack_kernel(x_emb_ref, enc_ref, tbias_ref, sbias_ref,
                         attn_ref, ln_ref, w1b_ref, w2b_ref, fln_ref,
                         out_ref):
    l = pl.program_id(0)
    n_layers = pl.num_programs(0)

    # activation is resident in out_ref across the layer axis; seed at l == 0
    @pl.when(l == 0)
    def _():
        out_ref[...] = x_emb_ref[...]

    x = out_ref[...]            # (B*S, D) flat activations
    enc = enc_ref[...]          # (B*S_enc, D) flat encoder output
    tbias = tbias_ref[...]      # (B, S, S)      additive mask bias
    sbias = sbias_ref[...]      # (B, S, S_enc)  additive mask bias
    attn = attn_ref[0]          # (2, D, 4D): [self | cross] packed QKVO
    ln = ln_ref[0]              # (6, D): ln1a, ln1b, ln2a, ln2b, ln3a, ln3b
    w1b = w1b_ref[0]            # (D+1, D_FF): [W1 ; b1]
    w2b = w2b_ref[0]            # (D_FF+1, D): [W2 ; b2]

    # 1) masked self-attention, pre-norm residual
    xn = _layernorm_k(x, ln[0:1], ln[1:2])
    x = x + _self_attn_k(xn, attn[0], tbias)

    # 2) cross-attention against encoder output, pre-norm residual
    xn = _layernorm_k(x, ln[2:3], ln[3:4])
    x = x + _cross_attn_k(xn, enc, attn[1], sbias)

    # 3) feed-forward (Linear -> ReLU -> Linear), pre-norm residual
    xn = _layernorm_k(x, ln[4:5], ln[5:6])
    hdn = jnp.maximum(
        jnp.dot(xn, w1b[:D_MODEL], preferred_element_type=jnp.float32)
        + w1b[D_MODEL:D_MODEL + 1], 0.0)
    x = x + (jnp.dot(hdn, w2b[:D_FF], preferred_element_type=jnp.float32)
             + w2b[D_FF:D_FF + 1])

    out_ref[...] = x

    # final LayerNorm fused into the last layer step
    @pl.when(l == n_layers - 1)
    def _():
        fln = fln_ref[...]      # (2, D): alpha, bias
        out_ref[...] = _layernorm_k(x, fln[0:1], fln[1:2])


def decoder_forward(token_ids, enc_out, tgt_mask, src_mask, params):
    B, S = token_ids.shape
    S_enc = enc_out.shape[1]
    stacked = params["stacked"]
    L = stacked["attn"].shape[0]

    # embedding + positional encoding (host-side JAX glue); dropout = identity
    x_emb = params["embedding"][token_ids] * math.sqrt(D_MODEL)
    x_emb = (x_emb + params["pe"][None, :S, :]).astype(jnp.float32)
    x_emb = x_emb.reshape(B * S, D_MODEL)                 # flat for the kernel
    enc_flat = enc_out.astype(jnp.float32).reshape(B * S_enc, D_MODEL)

    # additive float mask bias (0 where attended, -1e9 where masked)
    tbias = jnp.where(tgt_mask[:, 0] == 0, NEG_INF, 0.0).astype(jnp.float32)
    sbias = jnp.where(src_mask[:, 0] == 0, NEG_INF, 0.0).astype(jnp.float32)

    in_specs = [
        pl.BlockSpec((B * S, D_MODEL), lambda l: (0, 0)),               # x_emb
        pl.BlockSpec((B * S_enc, D_MODEL), lambda l: (0, 0)),           # enc
        pl.BlockSpec((B, S, S), lambda l: (0, 0, 0)),                   # tgt bias
        pl.BlockSpec((B, S, S_enc), lambda l: (0, 0, 0)),               # src bias
        pl.BlockSpec((1, 2, D_MODEL, 4 * D_MODEL),
                     lambda l: (l, 0, 0, 0)),                           # attn slab
        pl.BlockSpec((1, 6, D_MODEL), lambda l: (l, 0, 0)),             # ln slab
        pl.BlockSpec((1, D_MODEL + 1, D_FF), lambda l: (l, 0, 0)),      # [W1; b1]
        pl.BlockSpec((1, D_FF + 1, D_MODEL), lambda l: (l, 0, 0)),      # [W2; b2]
        pl.BlockSpec((2, D_MODEL), lambda l: (0, 0)),                   # final ln
    ]

    out_flat = pl.pallas_call(
        decoder_stack_kernel,
        out_shape=jax.ShapeDtypeStruct((B * S, D_MODEL), jnp.float32),
        grid=(L,),
        in_specs=in_specs,
        out_specs=pl.BlockSpec((B * S, D_MODEL), lambda l: (0, 0)),
        compiler_params=pltpu.CompilerParams(
            dimension_semantics=("arbitrary",)),
    )(x_emb, enc_flat, tbias, sbias,
      stacked["attn"], stacked["ln"], stacked["w1b"], stacked["w2b"],
      stacked["final_ln"])
    return out_flat.reshape(B, S, D_MODEL)


# ---------------------------------------------------------------------------
# parameters
# ---------------------------------------------------------------------------
def positional_encoding(max_len, d_model):
    position = jnp.arange(max_len, dtype=jnp.float32)[:, None]
    div_term = jnp.exp(jnp.arange(0, d_model, 2, dtype=jnp.float32)
                       * (-math.log(10000.0) / d_model))
    pe = jnp.zeros((max_len, d_model), dtype=jnp.float32)
    pe = pe.at[:, 0::2].set(jnp.sin(position * div_term))
    pe = pe.at[:, 1::2].set(jnp.cos(position * div_term))
    return pe


def pack_params(layers, norm_alpha, norm_bias):
    scale = 1.0 / math.sqrt(D_K)          # fold score scale into Wq (pack time)
    attn = jnp.stack([
        jnp.stack([
            jnp.concatenate([lp["wq1"] * scale, lp["wk1"], lp["wv1"], lp["wo1"]], axis=1),
            jnp.concatenate([lp["wq2"] * scale, lp["wk2"], lp["wv2"], lp["wo2"]], axis=1),
        ], axis=0)
        for lp in layers], axis=0)                                    # (L, 2, D, 4D)
    ln = jnp.stack([
        jnp.stack([lp["ln1a"], lp["ln1b"], lp["ln2a"], lp["ln2b"],
                   lp["ln3a"], lp["ln3b"]], axis=0)
        for lp in layers], axis=0)                                    # (L, 6, D)
    w1b = jnp.stack([jnp.concatenate([lp["w1"], lp["b1"][None, :]], axis=0)
                     for lp in layers], axis=0)                       # (L, D+1, D_FF)
    w2b = jnp.stack([jnp.concatenate([lp["w2"], lp["b2"][None, :]], axis=0)
                     for lp in layers], axis=0)                       # (L, D_FF+1, D)
    final_ln = jnp.stack([norm_alpha, norm_bias], axis=0)             # (2, D)
    return dict(attn=attn, ln=ln, w1b=w1b, w2b=w2b, final_ln=final_ln)


def init_params(key, vocab_size, n_layers, max_len_pe):
    keys = jax.random.split(key, 1 + n_layers)

    def rnd(k, shape):
        return (jax.random.normal(k, shape, jnp.float32) * 0.02).astype(jnp.float32)

    layers = []
    for i in range(n_layers):
        k = jax.random.split(keys[1 + i], 12)
        layers.append(dict(
            wq1=rnd(k[0], (D_MODEL, D_MODEL)), wk1=rnd(k[1], (D_MODEL, D_MODEL)),
            wv1=rnd(k[2], (D_MODEL, D_MODEL)), wo1=rnd(k[3], (D_MODEL, D_MODEL)),
            wq2=rnd(k[4], (D_MODEL, D_MODEL)), wk2=rnd(k[5], (D_MODEL, D_MODEL)),
            wv2=rnd(k[6], (D_MODEL, D_MODEL)), wo2=rnd(k[7], (D_MODEL, D_MODEL)),
            ln1a=jnp.ones((D_MODEL,), jnp.float32), ln1b=jnp.zeros((D_MODEL,), jnp.float32),
            ln2a=jnp.ones((D_MODEL,), jnp.float32), ln2b=jnp.zeros((D_MODEL,), jnp.float32),
            ln3a=jnp.ones((D_MODEL,), jnp.float32), ln3b=jnp.zeros((D_MODEL,), jnp.float32),
            w1=rnd(k[8], (D_MODEL, D_FF)), b1=rnd(k[10], (D_FF,)),
            w2=rnd(k[9], (D_FF, D_MODEL)), b2=rnd(k[11], (D_MODEL,)),
        ))

    params = {
        "embedding": rnd(keys[0], (vocab_size, D_MODEL)),
        "pe": positional_encoding(max_len_pe, D_MODEL),
        "norm_alpha": jnp.ones((D_MODEL,), jnp.float32),
        "norm_bias": jnp.zeros((D_MODEL,), jnp.float32),
        "layers": layers,
    }
    params["stacked"] = pack_params(layers, params["norm_alpha"], params["norm_bias"])
    return params


# ---------------------------------------------------------------------------
# pure-JAX reference (exact math, torch-equivalent) for correctness checking
# ---------------------------------------------------------------------------
def _layernorm_ref(x, alpha, bias):
    n = x.shape[-1]
    mean = jnp.mean(x, axis=-1, keepdims=True)
    var = jnp.sum((x - mean) ** 2, axis=-1, keepdims=True) / (n - 1)
    std = jnp.sqrt(var)
    return alpha * (x - mean) / (std + EPS) + bias


def _mha_ref(q_in, k_in, v_in, wq, wk, wv, wo, mask):
    B, Sq, _ = q_in.shape
    q = (q_in @ wq).reshape(B, Sq, N_HEADS, D_K).transpose(0, 2, 1, 3)
    k = (k_in @ wk).reshape(B, -1, N_HEADS, D_K).transpose(0, 2, 1, 3)
    v = (v_in @ wv).reshape(B, -1, N_HEADS, D_K).transpose(0, 2, 1, 3)
    scores = q @ jnp.swapaxes(k, -2, -1) / math.sqrt(D_K)
    scores = jnp.where(mask == 0, NEG_INF, scores)
    w = jax.nn.softmax(scores, axis=-1)
    ctx = (w @ v).transpose(0, 2, 1, 3).reshape(B, Sq, D_MODEL)
    return ctx @ wo


def decoder_forward_ref(token_ids, enc_out, tgt_mask, src_mask, params):
    S = token_ids.shape[1]
    x = params["embedding"][token_ids] * math.sqrt(D_MODEL)
    x = x + params["pe"][None, :S, :]
    for lp in params["layers"]:
        xn = _layernorm_ref(x, lp["ln1a"], lp["ln1b"])
        x = x + _mha_ref(xn, xn, xn, lp["wq1"], lp["wk1"], lp["wv1"], lp["wo1"], tgt_mask)
        xn = _layernorm_ref(x, lp["ln2a"], lp["ln2b"])
        x = x + _mha_ref(xn, enc_out, enc_out, lp["wq2"], lp["wk2"], lp["wv2"], lp["wo2"], src_mask)
        xn = _layernorm_ref(x, lp["ln3a"], lp["ln3b"])
        h = jnp.maximum(xn @ lp["w1"] + lp["b1"], 0.0)
        x = x + h @ lp["w2"] + lp["b2"]
    return _layernorm_ref(x, params["norm_alpha"], params["norm_bias"])


# ---------------------------------------------------------------------------
if __name__ == "__main__":
    B, S, S_ENC = 2, 8, 8
    VOCAB, N_LAYERS = 50, 2

    key = jax.random.PRNGKey(0)
    k_tok, k_enc, k_par = jax.random.split(key, 3)

    token_ids = jax.random.randint(k_tok, (B, S), 0, VOCAB, dtype=jnp.int32)
    enc_out = jax.random.normal(k_enc, (B, S_ENC, D_MODEL), jnp.float32)
    params = init_params(k_par, VOCAB, N_LAYERS, max_len_pe=S)

    # tgt mask: causal (1 = attend, 0 = masked); src mask: all ones (no padding)
    tgt_mask = jnp.broadcast_to(jnp.tril(jnp.ones((S, S), jnp.int32)), (B, 1, S, S))
    src_mask = jnp.ones((B, 1, S, S_ENC), jnp.int32)

    out = decoder_forward(token_ids, enc_out, tgt_mask, src_mask, params)
    out = jax.block_until_ready(out)

    ref = decoder_forward_ref(token_ids, enc_out, tgt_mask, src_mask, params)
    ref = jax.block_until_ready(ref)

    assert out.shape == (B, S, D_MODEL)
    assert bool(jnp.all(jnp.isfinite(out)))
    max_err = float(jnp.max(jnp.abs(out - ref)))
    assert bool(jnp.allclose(out, ref, atol=2e-2, rtol=2e-2)), (
        "max abs diff %f" % max_err)

    print("KERNEL_OK")
</pallas_src>

<mosaic_0001>
module attributes {stable_mosaic.version = 11 : i64} {
  func.func @decoder_stack_kernel(%arg0: i32, %arg1: memref<16x32xf32, #tpu.memory_space<vmem>>, %arg2: memref<16x32xf32, #tpu.memory_space<vmem>>, %arg3: memref<2x8x8xf32, #tpu.memory_space<vmem>>, %arg4: memref<2x8x8xf32, #tpu.memory_space<vmem>>, %arg5: memref<1x2x32x128xf32, #tpu.memory_space<vmem>>, %arg6: memref<1x6x32xf32, #tpu.memory_space<vmem>>, %arg7: memref<1x33x64xf32, #tpu.memory_space<vmem>>, %arg8: memref<1x65x32xf32, #tpu.memory_space<vmem>>, %arg9: memref<2x32xf32, #tpu.memory_space<vmem>>, %arg10: memref<16x32xf32, #tpu.memory_space<vmem>>) attributes {dimension_semantics = [#tpu.dimension_semantics<arbitrary>], iteration_bounds = array<i64: 2>, scalar_prefetch = 0 : i64, scratch_operands = 0 : i64, tpu.core_type = #tpu.core_type<tc>, window_params = [{pipeline_mode = #tpu.pipeline_mode<synchronous>, transform_indices = @transform_0, window_bounds = array<i64: 16, 32>}, {pipeline_mode = #tpu.pipeline_mode<synchronous>, transform_indices = @transform_1, window_bounds = array<i64: 16, 32>}, {pipeline_mode = #tpu.pipeline_mode<synchronous>, transform_indices = @transform_2, window_bounds = array<i64: 2, 8, 8>}, {pipeline_mode = #tpu.pipeline_mode<synchronous>, transform_indices = @transform_3, window_bounds = array<i64: 2, 8, 8>}, {transform_indices = @transform_4, window_bounds = array<i64: 1, 2, 32, 128>}, {transform_indices = @transform_5, window_bounds = array<i64: 1, 6, 32>}, {transform_indices = @transform_6, window_bounds = array<i64: 1, 33, 64>}, {transform_indices = @transform_7, window_bounds = array<i64: 1, 65, 32>}, {pipeline_mode = #tpu.pipeline_mode<synchronous>, transform_indices = @transform_8, window_bounds = array<i64: 2, 32>}, {pipeline_mode = #tpu.pipeline_mode<synchronous>, transform_indices = @transform_9, window_bounds = array<i64: 16, 32>}]} {
    %c0_i32 = arith.constant 0 : i32
    %0 = arith.cmpi eq, %arg0, %c0_i32 : i32
    %1 = arith.extui %0 : i1 to i32
    %c0_i32_0 = arith.constant 0 : i32
    %2 = arith.cmpi ne, %1, %c0_i32_0 : i32
    scf.if %2 {
      %c0_80 = arith.constant 0 : index
      %c0_81 = arith.constant 0 : index
      %266 = vector.load %arg1[%c0_80, %c0_81] : memref<16x32xf32, #tpu.memory_space<vmem>>, vector<16x32xf32>
      %c0_82 = arith.constant 0 : index
      %c0_83 = arith.constant 0 : index
      %267 = vector.load %arg10[%c0_82, %c0_83] : memref<16x32xf32, #tpu.memory_space<vmem>>, vector<16x32xf32>
      tpu.vector_store %arg10[%c0_82, %c0_83], %266 {strides = array<i32>} : memref<16x32xf32, #tpu.memory_space<vmem>>, vector<16x32xf32>,
    } else {
    }
    %c0 = arith.constant 0 : index
    %c0_1 = arith.constant 0 : index
    %3 = vector.load %arg10[%c0, %c0_1] : memref<16x32xf32, #tpu.memory_space<vmem>>, vector<16x32xf32>
    %c0_2 = arith.constant 0 : index
    %c0_3 = arith.constant 0 : index
    %4 = vector.load %arg2[%c0_2, %c0_3] : memref<16x32xf32, #tpu.memory_space<vmem>>, vector<16x32xf32>
    %c0_4 = arith.constant 0 : index
    %c0_5 = arith.constant 0 : index
    %c0_6 = arith.constant 0 : index
    %5 = vector.load %arg3[%c0_4, %c0_5, %c0_6] : memref<2x8x8xf32, #tpu.memory_space<vmem>>, vector<2x8x8xf32>
    %c0_7 = arith.constant 0 : index
    %c0_8 = arith.constant 0 : index
    %c0_9 = arith.constant 0 : index
    %6 = vector.load %arg4[%c0_7, %c0_8, %c0_9] : memref<2x8x8xf32, #tpu.memory_space<vmem>>, vector<2x8x8xf32>
    %c0_10 = arith.constant 0 : index
    %c0_11 = arith.constant 0 : index
    %c0_12 = arith.constant 0 : index
    %c0_13 = arith.constant 0 : index
    %7 = vector.load %arg5[%c0_10, %c0_11, %c0_12, %c0_13] : memref<1x2x32x128xf32, #tpu.memory_space<vmem>>, vector<1x2x32x128xf32>
    %8 = vector.shape_cast %7 : vector<1x2x32x128xf32> to vector<2x32x128xf32>
    %c0_14 = arith.constant 0 : index
    %c0_15 = arith.constant 0 : index
    %c0_16 = arith.constant 0 : index
    %9 = vector.load %arg6[%c0_14, %c0_15, %c0_16] : memref<1x6x32xf32, #tpu.memory_space<vmem>>, vector<1x6x32xf32>
    %10 = vector.shape_cast %9 : vector<1x6x32xf32> to vector<6x32xf32>
    %c0_17 = arith.constant 0 : index
    %c0_18 = arith.constant 0 : index
    %c0_19 = arith.constant 0 : index
    %11 = vector.load %arg7[%c0_17, %c0_18, %c0_19] : memref<1x33x64xf32, #tpu.memory_space<vmem>>, vector<1x33x64xf32>
    %12 = vector.shape_cast %11 : vector<1x33x64xf32> to vector<33x64xf32>
    %c0_20 = arith.constant 0 : index
    %c0_21 = arith.constant 0 : index
    %c0_22 = arith.constant 0 : index
    %13 = vector.load %arg8[%c0_20, %c0_21, %c0_22] : memref<1x65x32xf32, #tpu.memory_space<vmem>>, vector<1x65x32xf32>
    %14 = vector.shape_cast %13 : vector<1x65x32xf32> to vector<65x32xf32>
    %15 = vector.extract_strided_slice %10 {offsets = [0, 0], sizes = [1, 32], strides = [1, 1]} : vector<6x32xf32> to vector<1x32xf32>
    %16 = vector.extract_strided_slice %10 {offsets = [1, 0], sizes = [1, 32], strides = [1, 1]} : vector<6x32xf32> to vector<1x32xf32>
    %cst = arith.constant dense<0.000000e+00> : vector<16xf32>
    %17 = vector.multi_reduction <add>, %3, %cst [1] : vector<16x32xf32> to vector<16xf32>
    %18 = vector.shape_cast %17 : vector<16xf32> to vector<16x1xf32>
    %cst_23 = arith.constant 3.200000e+01 : f32
    %19 = vector.broadcast %cst_23 : f32 to vector<16x1xf32>
    %20 = arith.divf %18, %19 : vector<16x1xf32>
    %21 = vector.broadcast %20 : vector<16x1xf32> to vector<16x32xf32>
    %22 = arith.subf %3, %21 : vector<16x32xf32>
    %23 = arith.mulf %22, %22 : vector<16x32xf32>
    %cst_24 = arith.constant dense<0.000000e+00> : vector<16xf32>
    %24 = vector.multi_reduction <add>, %23, %cst_24 [1] : vector<16x32xf32> to vector<16xf32>
    %25 = vector.shape_cast %24 : vector<16xf32> to vector<16x1xf32>
    %cst_25 = arith.constant 0.0322580636 : f32
    %26 = vector.broadcast %cst_25 : f32 to vector<16x1xf32>
    %27 = arith.mulf %25, %26 : vector<16x1xf32>
    %28 = math.sqrt %27 : vector<16x1xf32>
    %cst_26 = arith.constant 9.99999997E-7 : f32
    %29 = vector.broadcast %cst_26 : f32 to vector<16x1xf32>
    %30 = arith.addf %28, %29 : vector<16x1xf32>
    %31 = tpu.reciprocal %30 {approx = true} : vector<16x1xf32> -> vector<16x1xf32>
    %32 = vector.broadcast %20 : vector<16x1xf32> to vector<16x32xf32>
    %33 = arith.subf %3, %32 : vector<16x32xf32>
    %34 = vector.broadcast %15 : vector<1x32xf32> to vector<16x32xf32>
    %35 = arith.mulf %34, %33 : vector<16x32xf32>
    %36 = vector.broadcast %31 : vector<16x1xf32> to vector<16x32xf32>
    %37 = arith.mulf %35, %36 : vector<16x32xf32>
    %38 = vector.broadcast %16 : vector<1x32xf32> to vector<16x32xf32>
    %39 = arith.addf %37, %38 : vector<16x32xf32>
    %40 = vector.extract_strided_slice %8 {offsets = [0, 0, 0], sizes = [1, 32, 128], strides = [1, 1, 1]} : vector<2x32x128xf32> to vector<1x32x128xf32>
    %41 = vector.shape_cast %40 : vector<1x32x128xf32> to vector<32x128xf32>
    %42 = vector.extract_strided_slice %41 {offsets = [0, 0], sizes = [32, 96], strides = [1, 1]} : vector<32x128xf32> to vector<32x96xf32>
    %cst_27 = arith.constant dense<0.000000e+00> : vector<16x96xf32>
    %43 = tpu.matmul %39, %42, %cst_27 {dimension_numbers = #tpu.dot_dimension_numbers<[1], [0], [0], [1], [0, 0, 1, 1], [], []>} : vector<16x32xf32>, vector<32x96xf32>, vector<16x96xf32> -> vector<16x96xf32>
    %44 = vector.extract_strided_slice %43 {offsets = [0, 0], sizes = [16, 32], strides = [1, 1]} : vector<16x96xf32> to vector<16x32xf32>
    %45 = vector.extract_strided_slice %43 {offsets = [0, 32], sizes = [16, 32], strides = [1, 1]} : vector<16x96xf32> to vector<16x32xf32>
    %46 = vector.extract_strided_slice %43 {offsets = [0, 64], sizes = [16, 32], strides = [1, 1]} : vector<16x96xf32> to vector<16x32xf32>
    %47 = vector.extract_strided_slice %41 {offsets = [0, 96], sizes = [32, 32], strides = [1, 1]} : vector<32x128xf32> to vector<32x32xf32>
    %48 = vector.shape_cast %44 : vector<16x32xf32> to vector<2x8x32xf32>
    %49 = vector.shape_cast %45 : vector<16x32xf32> to vector<2x8x32xf32>
    %50 = vector.shape_cast %46 : vector<16x32xf32> to vector<2x8x32xf32>
    %51 = vector.extract_strided_slice %48 {offsets = [0, 0, 0], sizes = [2, 8, 8], strides = [1, 1, 1]} : vector<2x8x32xf32> to vector<2x8x8xf32>
    %52 = vector.extract_strided_slice %49 {offsets = [0, 0, 0], sizes = [2, 8, 8], strides = [1, 1, 1]} : vector<2x8x32xf32> to vector<2x8x8xf32>
    "tpu.trace_start"() <{level = 10 : i32, message = "bqd,bkd->bqk"}> : () -> ()
    %cst_28 = arith.constant dense<0.000000e+00> : vector<2x8x8xf32>
    %53 = tpu.matmul %51, %52, %cst_28 {dimension_numbers = #tpu.dot_dimension_numbers<[2], [2], [1], [1], [0, 0, 0, 1, 1, 1], [0], [0]>} : vector<2x8x8xf32>, vector<2x8x8xf32>, vector<2x8x8xf32> -> vector<2x8x8xf32>
    "tpu.trace_stop"() : () -> ()
    %54 = arith.addf %53, %5 : vector<2x8x8xf32>
    %cst_29 = arith.constant dense<0xFF800000> : vector<2x8xf32>
    %55 = vector.multi_reduction <maximumf>, %54, %cst_29 [2] : vector<2x8x8xf32> to vector<2x8xf32>
    %56 = vector.shape_cast %55 : vector<2x8xf32> to vector<2x8x1xf32>
    %57 = vector.broadcast %56 : vector<2x8x1xf32> to vector<2x8x8xf32>
    %58 = arith.subf %54, %57 : vector<2x8x8xf32>
    %59 = math.exp %58 : vector<2x8x8xf32>
    %cst_30 = arith.constant dense<0.000000e+00> : vector<2x8xf32>
    %60 = vector.multi_reduction <add>, %59, %cst_30 [2] : vector<2x8x8xf32> to vector<2x8xf32>
    %61 = vector.shape_cast %60 : vector<2x8xf32> to vector<2x8x1xf32>
    %62 = tpu.reciprocal %61 {approx = true} : vector<2x8x1xf32> -> vector<2x8x1xf32>
    %63 = vector.broadcast %62 : vector<2x8x1xf32> to vector<2x8x8xf32>
    %64 = arith.mulf %59, %63 : vector<2x8x8xf32>
    %65 = vector.extract_strided_slice %50 {offsets = [0, 0, 0], sizes = [2, 8, 8], strides = [1, 1, 1]} : vector<2x8x32xf32> to vector<2x8x8xf32>
    "tpu.trace_start"() <{level = 10 : i32, message = "bqk,bkd->bqd"}> : () -> ()
    %cst_31 = arith.constant dense<0.000000e+00> : vector<2x8x8xf32>
    %66 = tpu.matmul %64, %65, %cst_31 {dimension_numbers = #tpu.dot_dimension_numbers<[2], [1], [1], [2], [0, 0, 0, 1, 1, 2], [0], [0]>} : vector<2x8x8xf32>, vector<2x8x8xf32>, vector<2x8x8xf32> -> vector<2x8x8xf32>
    "tpu.trace_stop"() : () -> ()
    %67 = vector.extract_strided_slice %48 {offsets = [0, 0, 8], sizes = [2, 8, 8], strides = [1, 1, 1]} : vector<2x8x32xf32> to vector<2x8x8xf32>
    %68 = vector.extract_strided_slice %49 {offsets = [0, 0, 8], sizes = [2, 8, 8], strides = [1, 1, 1]} : vector<2x8x32xf32> to vector<2x8x8xf32>
    "tpu.trace_start"() <{level = 10 : i32, message = "bqd,bkd->bqk"}> : () -> ()
    %cst_32 = arith.constant dense<0.000000e+00> : vector<2x8x8xf32>
    %69 = tpu.matmul %67, %68, %cst_32 {dimension_numbers = #tpu.dot_dimension_numbers<[2], [2], [1], [1], [0, 0, 0, 1, 1, 1], [0], [0]>} : vector<2x8x8xf32>, vector<2x8x8xf32>, vector<2x8x8xf32> -> vector<2x8x8xf32>
    "tpu.trace_stop"() : () -> ()
    %70 = arith.addf %69, %5 : vector<2x8x8xf32>
    %cst_33 = arith.constant dense<0xFF800000> : vector<2x8xf32>
    %71 = vector.multi_reduction <maximumf>, %70, %cst_33 [2] : vector<2x8x8xf32> to vector<2x8xf32>
    %72 = vector.shape_cast %71 : vector<2x8xf32> to vector<2x8x1xf32>
    %73 = vector.broadcast %72 : vector<2x8x1xf32> to vector<2x8x8xf32>
    %74 = arith.subf %70, %73 : vector<2x8x8xf32>
    %75 = math.exp %74 : vector<2x8x8xf32>
    %cst_34 = arith.constant dense<0.000000e+00> : vector<2x8xf32>
    %76 = vector.multi_reduction <add>, %75, %cst_34 [2] : vector<2x8x8xf32> to vector<2x8xf32>
    %77 = vector.shape_cast %76 : vector<2x8xf32> to vector<2x8x1xf32>
    %78 = tpu.reciprocal %77 {approx = true} : vector<2x8x1xf32> -> vector<2x8x1xf32>
    %79 = vector.broadcast %78 : vector<2x8x1xf32> to vector<2x8x8xf32>
    %80 = arith.mulf %75, %79 : vector<2x8x8xf32>
    %81 = vector.extract_strided_slice %50 {offsets = [0, 0, 8], sizes = [2, 8, 8], strides = [1, 1, 1]} : vector<2x8x32xf32> to vector<2x8x8xf32>
    "tpu.trace_start"() <{level = 10 : i32, message = "bqk,bkd->bqd"}> : () -> ()
    %cst_35 = arith.constant dense<0.000000e+00> : vector<2x8x8xf32>
    %82 = tpu.matmul %80, %81, %cst_35 {dimension_numbers = #tpu.dot_dimension_numbers<[2], [1], [1], [2], [0, 0, 0, 1, 1, 2], [0], [0]>} : vector<2x8x8xf32>, vector<2x8x8xf32>, vector<2x8x8xf32> -> vector<2x8x8xf32>
    "tpu.trace_stop"() : () -> ()
    %83 = vector.extract_strided_slice %48 {offsets = [0, 0, 16], sizes = [2, 8, 8], strides = [1, 1, 1]} : vector<2x8x32xf32> to vector<2x8x8xf32>
    %84 = vector.extract_strided_slice %49 {offsets = [0, 0, 16], sizes = [2, 8, 8], strides = [1, 1, 1]} : vector<2x8x32xf32> to vector<2x8x8xf32>
    "tpu.trace_start"() <{level = 10 : i32, message = "bqd,bkd->bqk"}> : () -> ()
    %cst_36 = arith.constant dense<0.000000e+00> : vector<2x8x8xf32>
    %85 = tpu.matmul %83, %84, %cst_36 {dimension_numbers = #tpu.dot_dimension_numbers<[2], [2], [1], [1], [0, 0, 0, 1, 1, 1], [0], [0]>} : vector<2x8x8xf32>, vector<2x8x8xf32>, vector<2x8x8xf32> -> vector<2x8x8xf32>
    "tpu.trace_stop"() : () -> ()
    %86 = arith.addf %85, %5 : vector<2x8x8xf32>
    %cst_37 = arith.constant dense<0xFF800000> : vector<2x8xf32>
    %87 = vector.multi_reduction <maximumf>, %86, %cst_37 [2] : vector<2x8x8xf32> to vector<2x8xf32>
    %88 = vector.shape_cast %87 : vector<2x8xf32> to vector<2x8x1xf32>
    %89 = vector.broadcast %88 : vector<2x8x1xf32> to vector<2x8x8xf32>
    %90 = arith.subf %86, %89 : vector<2x8x8xf32>
    %91 = math.exp %90 : vector<2x8x8xf32>
    %cst_38 = arith.constant dense<0.000000e+00> : vector<2x8xf32>
    %92 = vector.multi_reduction <add>, %91, %cst_38 [2] : vector<2x8x8xf32> to vector<2x8xf32>
    %93 = vector.shape_cast %92 : vector<2x8xf32> to vector<2x8x1xf32>
    %94 = tpu.reciprocal %93 {approx = true} : vector<2x8x1xf32> -> vector<2x8x1xf32>
    %95 = vector.broadcast %94 : vector<2x8x1xf32> to vector<2x8x8xf32>
    %96 = arith.mulf %91, %95 : vector<2x8x8xf32>
    %97 = vector.extract_strided_slice %50 {offsets = [0, 0, 16], sizes = [2, 8, 8], strides = [1, 1, 1]} : vector<2x8x32xf32> to vector<2x8x8xf32>
    "tpu.trace_start"() <{level = 10 : i32, message = "bqk,bkd->bqd"}> : () -> ()
    %cst_39 = arith.constant dense<0.000000e+00> : vector<2x8x8xf32>
    %98 = tpu.matmul %96, %97, %cst_39 {dimension_numbers = #tpu.dot_dimension_numbers<[2], [1], [1], [2], [0, 0, 0, 1, 1, 2], [0], [0]>} : vector<2x8x8xf32>, vector<2x8x8xf32>, vector<2x8x8xf32> -> vector<2x8x8xf32>
    "tpu.trace_stop"() : () -> ()
    %99 = vector.extract_strided_slice %48 {offsets = [0, 0, 24], sizes = [2, 8, 8], strides = [1, 1, 1]} : vector<2x8x32xf32> to vector<2x8x8xf32>
    %100 = vector.extract_strided_slice %49 {offsets = [0, 0, 24], sizes = [2, 8, 8], strides = [1, 1, 1]} : vector<2x8x32xf32> to vector<2x8x8xf32>
    "tpu.trace_start"() <{level = 10 : i32, message = "bqd,bkd->bqk"}> : () -> ()
    %cst_40 = arith.constant dense<0.000000e+00> : vector<2x8x8xf32>
    %101 = tpu.matmul %99, %100, %cst_40 {dimension_numbers = #tpu.dot_dimension_numbers<[2], [2], [1], [1], [0, 0, 0, 1, 1, 1], [0], [0]>} : vector<2x8x8xf32>, vector<2x8x8xf32>, vector<2x8x8xf32> -> vector<2x8x8xf32>
    "tpu.trace_stop"() : () -> ()
    %102 = arith.addf %101, %5 : vector<2x8x8xf32>
    %cst_41 = arith.constant dense<0xFF800000> : vector<2x8xf32>
    %103 = vector.multi_reduction <maximumf>, %102, %cst_41 [2] : vector<2x8x8xf32> to vector<2x8xf32>
    %104 = vector.shape_cast %103 : vector<2x8xf32> to vector<2x8x1xf32>
    %105 = vector.broadcast %104 : vector<2x8x1xf32> to vector<2x8x8xf32>
    %106 = arith.subf %102, %105 : vector<2x8x8xf32>
    %107 = math.exp %106 : vector<2x8x8xf32>
    %cst_42 = arith.constant dense<0.000000e+00> : vector<2x8xf32>
    %108 = vector.multi_reduction <add>, %107, %cst_42 [2] : vector<2x8x8xf32> to vector<2x8xf32>
    %109 = vector.shape_cast %108 : vector<2x8xf32> to vector<2x8x1xf32>
    %110 = tpu.reciprocal %109 {approx = true} : vector<2x8x1xf32> -> vector<2x8x1xf32>
    %111 = vector.broadcast %110 : vector<2x8x1xf32> to vector<2x8x8xf32>
    %112 = arith.mulf %107, %111 : vector<2x8x8xf32>
    %113 = vector.extract_strided_slice %50 {offsets = [0, 0, 24], sizes = [2, 8, 8], strides = [1, 1, 1]} : vector<2x8x32xf32> to vector<2x8x8xf32>
    "tpu.trace_start"() <{level = 10 : i32, message = "bqk,bkd->bqd"}> : () -> ()
    %cst_43 = arith.constant dense<0.000000e+00> : vector<2x8x8xf32>
    %114 = tpu.matmul %112, %113, %cst_43 {dimension_numbers = #tpu.dot_dimension_numbers<[2], [1], [1], [2], [0, 0, 0, 1, 1, 2], [0], [0]>} : vector<2x8x8xf32>, vector<2x8x8xf32>, vector<2x8x8xf32> -> vector<2x8x8xf32>
    "tpu.trace_stop"() : () -> ()
    %115 = tpu.concatenate %66, %82, %98, %114 in 2 : vector<2x8x8xf32>, vector<2x8x8xf32>, vector<2x8x8xf32>, vector<2x8x8xf32> -> vector<2x8x32xf32>
    %116 = vector.shape_cast %115 : vector<2x8x32xf32> to vector<16x32xf32>
    %cst_44 = arith.constant dense<0.000000e+00> : vector<16x32xf32>
    %117 = tpu.matmul %116, %47, %cst_44 {dimension_numbers = #tpu.dot_dimension_numbers<[1], [0], [0], [1], [0, 0, 1, 1], [], []>} : vector<16x32xf32>, vector<32x32xf32>, vector<16x32xf32> -> vector<16x32xf32>
    %118 = arith.addf %3, %117 : vector<16x32xf32>
    %119 = vector.extract_strided_slice %10 {offsets = [2, 0], sizes = [1, 32], strides = [1, 1]} : vector<6x32xf32> to vector<1x32xf32>
    %120 = vector.extract_strided_slice %10 {offsets = [3, 0], sizes = [1, 32], strides = [1, 1]} : vector<6x32xf32> to vector<1x32xf32>
    %cst_45 = arith.constant dense<0.000000e+00> : vector<16xf32>
    %121 = vector.multi_reduction <add>, %118, %cst_45 [1] : vector<16x32xf32> to vector<16xf32>
    %122 = vector.shape_cast %121 : vector<16xf32> to vector<16x1xf32>
    %cst_46 = arith.constant 3.200000e+01 : f32
    %123 = vector.broadcast %cst_46 : f32 to vector<16x1xf32>
    %124 = arith.divf %122, %123 : vector<16x1xf32>
    %125 = vector.broadcast %124 : vector<16x1xf32> to vector<16x32xf32>
    %126 = arith.subf %118, %125 : vector<16x32xf32>
    %127 = arith.mulf %126, %126 : vector<16x32xf32>
    %cst_47 = arith.constant dense<0.000000e+00> : vector<16xf32>
    %128 = vector.multi_reduction <add>, %127, %cst_47 [1] : vector<16x32xf32> to vector<16xf32>
    %129 = vector.shape_cast %128 : vector<16xf32> to vector<16x1xf32>
    %cst_48 = arith.constant 0.0322580636 : f32
    %130 = vector.broadcast %cst_48 : f32 to vector<16x1xf32>
    %131 = arith.mulf %129, %130 : vector<16x1xf32>
    %132 = math.sqrt %131 : vector<16x1xf32>
    %cst_49 = arith.constant 9.99999997E-7 : f32
    %133 = vector.broadcast %cst_49 : f32 to vector<16x1xf32>
    %134 = arith.addf %132, %133 : vector<16x1xf32>
    %135 = tpu.reciprocal %134 {approx = true} : vector<16x1xf32> -> vector<16x1xf32>
    %136 = vector.broadcast %124 : vector<16x1xf32> to vector<16x32xf32>
    %137 = arith.subf %118, %136 : vector<16x32xf32>
    %138 = vector.broadcast %119 : vector<1x32xf32> to vector<16x32xf32>
    %139 = arith.mulf %138, %137 : vector<16x32xf32>
    %140 = vector.broadcast %135 : vector<16x1xf32> to vector<16x32xf32>
    %141 = arith.mulf %139, %140 : vector<16x32xf32>
    %142 = vector.broadcast %120 : vector<1x32xf32> to vector<16x32xf32>
    %143 = arith.addf %141, %142 : vector<16x32xf32>
    %144 = vector.extract_strided_slice %8 {offsets = [1, 0, 0], sizes = [1, 32, 128], strides = [1, 1, 1]} : vector<2x32x128xf32> to vector<1x32x128xf32>
    %145 = vector.shape_cast %144 : vector<1x32x128xf32> to vector<32x128xf32>
    %146 = vector.extract_strided_slice %145 {offsets = [0, 0], sizes = [32, 32], strides = [1, 1]} : vector<32x128xf32> to vector<32x32xf32>
    %cst_50 = arith.constant dense<0.000000e+00> : vector<16x32xf32>
    %147 = tpu.matmul %143, %146, %cst_50 {dimension_numbers = #tpu.dot_dimension_numbers<[1], [0], [0], [1], [0, 0, 1, 1], [], []>} : vector<16x32xf32>, vector<32x32xf32>, vector<16x32xf32> -> vector<16x32xf32>
    %148 = vector.extract_strided_slice %145 {offsets = [0, 32], sizes = [32, 64], strides = [1, 1]} : vector<32x128xf32> to vector<32x64xf32>
    %cst_51 = arith.constant dense<0.000000e+00> : vector<16x64xf32>
    %149 = tpu.matmul %4, %148, %cst_51 {dimension_numbers = #tpu.dot_dimension_numbers<[1], [0], [0], [1], [0, 0, 1, 1], [], []>} : vector<16x32xf32>, vector<32x64xf32>, vector<16x64xf32> -> vector<16x64xf32>
    %150 = vector.extract_strided_slice %149 {offsets = [0, 0], sizes = [16, 32], strides = [1, 1]} : vector<16x64xf32> to vector<16x32xf32>
    %151 = vector.extract_strided_slice %149 {offsets = [0, 32], sizes = [16, 32], strides = [1, 1]} : vector<16x64xf32> to vector<16x32xf32>
    %152 = vector.extract_strided_slice %145 {offsets = [0, 96], sizes = [32, 32], strides = [1, 1]} : vector<32x128xf32> to vector<32x32xf32>
    %153 = vector.shape_cast %147 : vector<16x32xf32> to vector<2x8x32xf32>
    %154 = vector.shape_cast %150 : vector<16x32xf32> to vector<2x8x32xf32>
    %155 = vector.shape_cast %151 : vector<16x32xf32> to vector<2x8x32xf32>
    %156 = vector.extract_strided_slice %153 {offsets = [0, 0, 0], sizes = [2, 8, 8], strides = [1, 1, 1]} : vector<2x8x32xf32> to vector<2x8x8xf32>
    %157 = vector.extract_strided_slice %154 {offsets = [0, 0, 0], sizes = [2, 8, 8], strides = [1, 1, 1]} : vector<2x8x32xf32> to vector<2x8x8xf32>
    "tpu.trace_start"() <{level = 10 : i32, message = "bqd,bkd->bqk"}> : () -> ()
    %cst_52 = arith.constant dense<0.000000e+00> : vector<2x8x8xf32>
    %158 = tpu.matmul %156, %157, %cst_52 {dimension_numbers = #tpu.dot_dimension_numbers<[2], [2], [1], [1], [0, 0, 0, 1, 1, 1], [0], [0]>} : vector<2x8x8xf32>, vector<2x8x8xf32>, vector<2x8x8xf32> -> vector<2x8x8xf32>
    "tpu.trace_stop"() : () -> ()
    %159 = arith.addf %158, %6 : vector<2x8x8xf32>
    %cst_53 = arith.constant dense<0xFF800000> : vector<2x8xf32>
    %160 = vector.multi_reduction <maximumf>, %159, %cst_53 [2] : vector<2x8x8xf32> to vector<2x8xf32>
    %161 = vector.shape_cast %160 : vector<2x8xf32> to vector<2x8x1xf32>
    %162 = vector.broadcast %161 : vector<2x8x1xf32> to vector<2x8x8xf32>
    %163 = arith.subf %159, %162 : vector<2x8x8xf32>
    %164 = math.exp %163 : vector<2x8x8xf32>
    %cst_54 = arith.constant dense<0.000000e+00> : vector<2x8xf32>
    %165 = vector.multi_reduction <add>, %164, %cst_54 [2] : vector<2x8x8xf32> to vector<2x8xf32>
    %166 = vector.shape_cast %165 : vector<2x8xf32> to vector<2x8x1xf32>
    %167 = tpu.reciprocal %166 {approx = true} : vector<2x8x1xf32> -> vector<2x8x1xf32>
    %168 = vector.broadcast %167 : vector<2x8x1xf32> to vector<2x8x8xf32>
    %169 = arith.mulf %164, %168 : vector<2x8x8xf32>
    %170 = vector.extract_strided_slice %155 {offsets = [0, 0, 0], sizes = [2, 8, 8], strides = [1, 1, 1]} : vector<2x8x32xf32> to vector<2x8x8xf32>
    "tpu.trace_start"() <{level = 10 : i32, message = "bqk,bkd->bqd"}> : () -> ()
    %cst_55 = arith.constant dense<0.000000e+00> : vector<2x8x8xf32>
    %171 = tpu.matmul %169, %170, %cst_55 {dimension_numbers = #tpu.dot_dimension_numbers<[2], [1], [1], [2], [0, 0, 0, 1, 1, 2], [0], [0]>} : vector<2x8x8xf32>, vector<2x8x8xf32>, vector<2x8x8xf32> -> vector<2x8x8xf32>
    "tpu.trace_stop"() : () -> ()
    %172 = vector.extract_strided_slice %153 {offsets = [0, 0, 8], sizes = [2, 8, 8], strides = [1, 1, 1]} : vector<2x8x32xf32> to vector<2x8x8xf32>
    %173 = vector.extract_strided_slice %154 {offsets = [0, 0, 8], sizes = [2, 8, 8], strides = [1, 1, 1]} : vector<2x8x32xf32> to vector<2x8x8xf32>
    "tpu.trace_start"() <{level = 10 : i32, message = "bqd,bkd->bqk"}> : () -> ()
    %cst_56 = arith.constant dense<0.000000e+00> : vector<2x8x8xf32>
    %174 = tpu.matmul %172, %173, %cst_56 {dimension_numbers = #tpu.dot_dimension_numbers<[2], [2], [1], [1], [0, 0, 0, 1, 1, 1], [0], [0]>} : vector<2x8x8xf32>, vector<2x8x8xf32>, vector<2x8x8xf32> -> vector<2x8x8xf32>
    "tpu.trace_stop"() : () -> ()
    %175 = arith.addf %174, %6 : vector<2x8x8xf32>
    %cst_57 = arith.constant dense<0xFF800000> : vector<2x8xf32>
    %176 = vector.multi_reduction <maximumf>, %175, %cst_57 [2] : vector<2x8x8xf32> to vector<2x8xf32>
    %177 = vector.shape_cast %176 : vector<2x8xf32> to vector<2x8x1xf32>
    %178 = vector.broadcast %177 : vector<2x8x1xf32> to vector<2x8x8xf32>
    %179 = arith.subf %175, %178 : vector<2x8x8xf32>
    %180 = math.exp %179 : vector<2x8x8xf32>
    %cst_58 = arith.constant dense<0.000000e+00> : vector<2x8xf32>
    %181 = vector.multi_reduction <add>, %180, %cst_58 [2] : vector<2x8x8xf32> to vector<2x8xf32>
    %182 = vector.shape_cast %181 : vector<2x8xf32> to vector<2x8x1xf32>
    %183 = tpu.reciprocal %182 {approx = true} : vector<2x8x1xf32> -> vector<2x8x1xf32>
    %184 = vector.broadcast %183 : vector<2x8x1xf32> to vector<2x8x8xf32>
    %185 = arith.mulf %180, %184 : vector<2x8x8xf32>
    %186 = vector.extract_strided_slice %155 {offsets = [0, 0, 8], sizes = [2, 8, 8], strides = [1, 1, 1]} : vector<2x8x32xf32> to vector<2x8x8xf32>
    "tpu.trace_start"() <{level = 10 : i32, message = "bqk,bkd->bqd"}> : () -> ()
    %cst_59 = arith.constant dense<0.000000e+00> : vector<2x8x8xf32>
    %187 = tpu.matmul %185, %186, %cst_59 {dimension_numbers = #tpu.dot_dimension_numbers<[2], [1], [1], [2], [0, 0, 0, 1, 1, 2], [0], [0]>} : vector<2x8x8xf32>, vector<2x8x8xf32>, vector<2x8x8xf32> -> vector<2x8x8xf32>
    "tpu.trace_stop"() : () -> ()
    %188 = vector.extract_strided_slice %153 {offsets = [0, 0, 16], sizes = [2, 8, 8], strides = [1, 1, 1]} : vector<2x8x32xf32> to vector<2x8x8xf32>
    %189 = vector.extract_strided_slice %154 {offsets = [0, 0, 16], sizes = [2, 8, 8], strides = [1, 1, 1]} : vector<2x8x32xf32> to vector<2x8x8xf32>
    "tpu.trace_start"() <{level = 10 : i32, message = "bqd,bkd->bqk"}> : () -> ()
    %cst_60 = arith.constant dense<0.000000e+00> : vector<2x8x8xf32>
    %190 = tpu.matmul %188, %189, %cst_60 {dimension_numbers = #tpu.dot_dimension_numbers<[2], [2], [1], [1], [0, 0, 0, 1, 1, 1], [0], [0]>} : vector<2x8x8xf32>, vector<2x8x8xf32>, vector<2x8x8xf32> -> vector<2x8x8xf32>
    "tpu.trace_stop"() : () -> ()
    %191 = arith.addf %190, %6 : vector<2x8x8xf32>
    %cst_61 = arith.constant dense<0xFF800000> : vector<2x8xf32>
    %192 = vector.multi_reduction <maximumf>, %191, %cst_61 [2] : vector<2x8x8xf32> to vector<2x8xf32>
    %193 = vector.shape_cast %192 : vector<2x8xf32> to vector<2x8x1xf32>
    %194 = vector.broadcast %193 : vector<2x8x1xf32> to vector<2x8x8xf32>
    %195 = arith.subf %191, %194 : vector<2x8x8xf32>
    %196 = math.exp %195 : vector<2x8x8xf32>
    %cst_62 = arith.constant dense<0.000000e+00> : vector<2x8xf32>
    %197 = vector.multi_reduction <add>, %196, %cst_62 [2] : vector<2x8x8xf32> to vector<2x8xf32>
    %198 = vector.shape_cast %197 : vector<2x8xf32> to vector<2x8x1xf32>
    %199 = tpu.reciprocal %198 {approx = true} : vector<2x8x1xf32> -> vector<2x8x1xf32>
    %200 = vector.broadcast %199 : vector<2x8x1xf32> to vector<2x8x8xf32>
    %201 = arith.mulf %196, %200 : vector<2x8x8xf32>
    %202 = vector.extract_strided_slice %155 {offsets = [0, 0, 16], sizes = [2, 8, 8], strides = [1, 1, 1]} : vector<2x8x32xf32> to vector<2x8x8xf32>
    "tpu.trace_start"() <{level = 10 : i32, message = "bqk,bkd->bqd"}> : () -> ()
    %cst_63 = arith.constant dense<0.000000e+00> : vector<2x8x8xf32>
    %203 = tpu.matmul %201, %202, %cst_63 {dimension_numbers = #tpu.dot_dimension_numbers<[2], [1], [1], [2], [0, 0, 0, 1, 1, 2], [0], [0]>} : vector<2x8x8xf32>, vector<2x8x8xf32>, vector<2x8x8xf32> -> vector<2x8x8xf32>
    "tpu.trace_stop"() : () -> ()
    %204 = vector.extract_strided_slice %153 {offsets = [0, 0, 24], sizes = [2, 8, 8], strides = [1, 1, 1]} : vector<2x8x32xf32> to vector<2x8x8xf32>
    %205 = vector.extract_strided_slice %154 {offsets = [0, 0, 24], sizes = [2, 8, 8], strides = [1, 1, 1]} : vector<2x8x32xf32> to vector<2x8x8xf32>
    "tpu.trace_start"() <{level = 10 : i32, message = "bqd,bkd->bqk"}> : () -> ()
    %cst_64 = arith.constant dense<0.000000e+00> : vector<2x8x8xf32>
    %206 = tpu.matmul %204, %205, %cst_64 {dimension_numbers = #tpu.dot_dimension_numbers<[2], [2], [1], [1], [0, 0, 0, 1, 1, 1], [0], [0]>} : vector<2x8x8xf32>, vector<2x8x8xf32>, vector<2x8x8xf32> -> vector<2x8x8xf32>
    "tpu.trace_stop"() : () -> ()
    %207 = arith.addf %206, %6 : vector<2x8x8xf32>
    %cst_65 = arith.constant dense<0xFF800000> : vector<2x8xf32>
    %208 = vector.multi_reduction <maximumf>, %207, %cst_65 [2] : vector<2x8x8xf32> to vector<2x8xf32>
    %209 = vector.shape_cast %208 : vector<2x8xf32> to vector<2x8x1xf32>
    %210 = vector.broadcast %209 : vector<2x8x1xf32> to vector<2x8x8xf32>
    %211 = arith.subf %207, %210 : vector<2x8x8xf32>
    %212 = math.exp %211 : vector<2x8x8xf32>
    %cst_66 = arith.constant dense<0.000000e+00> : vector<2x8xf32>
    %213 = vector.multi_reduction <add>, %212, %cst_66 [2] : vector<2x8x8xf32> to vector<2x8xf32>
    %214 = vector.shape_cast %213 : vector<2x8xf32> to vector<2x8x1xf32>
    %215 = tpu.reciprocal %214 {approx = true} : vector<2x8x1xf32> -> vector<2x8x1xf32>
    %216 = vector.broadcast %215 : vector<2x8x1xf32> to vector<2x8x8xf32>
    %217 = arith.mulf %212, %216 : vector<2x8x8xf32>
    %218 = vector.extract_strided_slice %155 {offsets = [0, 0, 24], sizes = [2, 8, 8], strides = [1, 1, 1]} : vector<2x8x32xf32> to vector<2x8x8xf32>
    "tpu.trace_start"() <{level = 10 : i32, message = "bqk,bkd->bqd"}> : () -> ()
    %cst_67 = arith.constant dense<0.000000e+00> : vector<2x8x8xf32>
    %219 = tpu.matmul %217, %218, %cst_67 {dimension_numbers = #tpu.dot_dimension_numbers<[2], [1], [1], [2], [0, 0, 0, 1, 1, 2], [0], [0]>} : vector<2x8x8xf32>, vector<2x8x8xf32>, vector<2x8x8xf32> -> vector<2x8x8xf32>
    "tpu.trace_stop"() : () -> ()
    %220 = tpu.concatenate %171, %187, %203, %219 in 2 : vector<2x8x8xf32>, vector<2x8x8xf32>, vector<2x8x8xf32>, vector<2x8x8xf32> -> vector<2x8x32xf32>
    %221 = vector.shape_cast %220 : vector<2x8x32xf32> to vector<16x32xf32>
    %cst_68 = arith.constant dense<0.000000e+00> : vector<16x32xf32>
    %222 = tpu.matmul %221, %152, %cst_68 {dimension_numbers = #tpu.dot_dimension_numbers<[1], [0], [0], [1], [0, 0, 1, 1], [], []>} : vector<16x32xf32>, vector<32x32xf32>, vector<16x32xf32> -> vector<16x32xf32>
    %223 = arith.addf %118, %222 : vector<16x32xf32>
    %224 = vector.extract_strided_slice %10 {offsets = [4, 0], sizes = [1, 32], strides = [1, 1]} : vector<6x32xf32> to vector<1x32xf32>
    %225 = vector.extract_strided_slice %10 {offsets = [5, 0], sizes = [1, 32], strides = [1, 1]} : vector<6x32xf32> to vector<1x32xf32>
    %cst_69 = arith.constant dense<0.000000e+00> : vector<16xf32>
    %226 = vector.multi_reduction <add>, %223, %cst_69 [1] : vector<16x32xf32> to vector<16xf32>
    %227 = vector.shape_cast %226 : vector<16xf32> to vector<16x1xf32>
    %cst_70 = arith.constant 3.200000e+01 : f32
    %228 = vector.broadcast %cst_70 : f32 to vector<16x1xf32>
    %229 = arith.divf %227, %228 : vector<16x1xf32>
    %230 = vector.broadcast %229 : vector<16x1xf32> to vector<16x32xf32>
    %231 = arith.subf %223, %230 : vector<16x32xf32>
    %232 = arith.mulf %231, %231 : vector<16x32xf32>
    %cst_71 = arith.constant dense<0.000000e+00> : vector<16xf32>
    %233 = vector.multi_reduction <add>, %232, %cst_71 [1] : vector<16x32xf32> to vector<16xf32>
    %234 = vector.shape_cast %233 : vector<16xf32> to vector<16x1xf32>
    %cst_72 = arith.constant 0.0322580636 : f32
    %235 = vector.broadcast %cst_72 : f32 to vector<16x1xf32>
    %236 = arith.mulf %234, %235 : vector<16x1xf32>
    %237 = math.sqrt %236 : vector<16x1xf32>
    %cst_73 = arith.constant 9.99999997E-7 : f32
    %238 = vector.broadcast %cst_73 : f32 to vector<16x1xf32>
    %239 = arith.addf %237, %238 : vector<16x1xf32>
    %240 = tpu.reciprocal %239 {approx = true} : vector<16x1xf32> -> vector<16x1xf32>
    %241 = vector.broadcast %229 : vector<16x1xf32> to vector<16x32xf32>
    %242 = arith.subf %223, %241 : vector<16x32xf32>
    %243 = vector.broadcast %224 : vector<1x32xf32> to vector<16x32xf32>
    %244 = arith.mulf %243, %242 : vector<16x32xf32>
    %245 = vector.broadcast %240 : vector<16x1xf32> to vector<16x32xf32>
    %246 = arith.mulf %244, %245 : vector<16x32xf32>
    %247 = vector.broadcast %225 : vector<1x32xf32> to vector<16x32xf32>
    %248 = arith.addf %246, %247 : vector<16x32xf32>
    %249 = vector.extract_strided_slice %12 {offsets = [0, 0], sizes = [32, 64], strides = [1, 1]} : vector<33x64xf32> to vector<32x64xf32>
    %cst_74 = arith.constant dense<0.000000e+00> : vector<16x64xf32>
    %250 = tpu.matmul %248, %249, %cst_74 {dimension_numbers = #tpu.dot_dimension_numbers<[1], [0], [0], [1], [0, 0, 1, 1], [], []>} : vector<16x32xf32>, vector<32x64xf32>, vector<16x64xf32> -> vector<16x64xf32>
    %251 = vector.extract_strided_slice %12 {offsets = [32, 0], sizes = [1, 64], strides = [1, 1]} : vector<33x64xf32> to vector<1x64xf32>
    %252 = vector.broadcast %251 : vector<1x64xf32> to vector<16x64xf32>
    %253 = arith.addf %250, %252 : vector<16x64xf32>
    %cst_75 = arith.constant 0.000000e+00 : f32
    %254 = vector.broadcast %cst_75 : f32 to vector<16x64xf32>
    %255 = arith.maximumf %253, %254 : vector<16x64xf32>
    %256 = vector.extract_strided_slice %14 {offsets = [0, 0], sizes = [64, 32], strides = [1, 1]} : vector<65x32xf32> to vector<64x32xf32>
    %cst_76 = arith.constant dense<0.000000e+00> : vector<16x32xf32>
    %257 = tpu.matmul %255, %256, %cst_76 {dimension_numbers = #tpu.dot_dimension_numbers<[1], [0], [0], [1], [0, 0, 1, 1], [], []>} : vector<16x64xf32>, vector<64x32xf32>, vector<16x32xf32> -> vector<16x32xf32>
    %258 = vector.extract_strided_slice %14 {offsets = [64, 0], sizes = [1, 32], strides = [1, 1]} : vector<65x32xf32> to vector<1x32xf32>
    %259 = vector.broadcast %258 : vector<1x32xf32> to vector<16x32xf32>
    %260 = arith.addf %257, %259 : vector<16x32xf32>
    %261 = arith.addf %223, %260 : vector<16x32xf32>
    %c0_77 = arith.constant 0 : index
    %c0_78 = arith.constant 0 : index
    %262 = vector.load %arg10[%c0_77, %c0_78] : memref<16x32xf32, #tpu.memory_space<vmem>>, vector<16x32xf32>
    tpu.vector_store %arg10[%c0_77, %c0_78], %261 {strides = array<i32>} : memref<16x32xf32, #tpu.memory_space<vmem>>, vector<16x32xf32>,
    %c1_i32 = arith.constant 1 : i32
    %263 = arith.cmpi eq, %arg0, %c1_i32 : i32
    %264 = arith.extui %263 : i1 to i32
    %c0_i32_79 = arith.constant 0 : i32
    %265 = arith.cmpi ne, %264, %c0_i32_79 : i32
    scf.if %265 {
      %c0_80 = arith.constant 0 : index
      %c0_81 = arith.constant 0 : index
      %266 = vector.load %arg9[%c0_80, %c0_81] : memref<2x32xf32, #tpu.memory_space<vmem>>, vector<2x32xf32>
      %267 = vector.extract_strided_slice %266 {offsets = [0, 0], sizes = [1, 32], strides = [1, 1]} : vector<2x32xf32> to vector<1x32xf32>
      %268 = vector.extract_strided_slice %266 {offsets = [1, 0], sizes = [1, 32], strides = [1, 1]} : vector<2x32xf32> to vector<1x32xf32>
      %cst_82 = arith.constant dense<0.000000e+00> : vector<16xf32>
      %269 = vector.multi_reduction <add>, %261, %cst_82 [1] : vector<16x32xf32> to vector<16xf32>
      %270 = vector.shape_cast %269 : vector<16xf32> to vector<16x1xf32>
      %cst_83 = arith.constant 3.200000e+01 : f32
      %271 = vector.broadcast %cst_83 : f32 to vector<16x1xf32>
      %272 = arith.divf %270, %271 : vector<16x1xf32>
      %273 = vector.broadcast %272 : vector<16x1xf32> to vector<16x32xf32>
      %274 = arith.subf %261, %273 : vector<16x32xf32>
      %275 = arith.mulf %274, %274 : vector<16x32xf32>
      %cst_84 = arith.constant dense<0.000000e+00> : vector<16xf32>
      %276 = vector.multi_reduction <add>, %275, %cst_84 [1] : vector<16x32xf32> to vector<16xf32>
      %277 = vector.shape_cast %276 : vector<16xf32> to vector<16x1xf32>
      %cst_85 = arith.constant 0.0322580636 : f32
      %278 = vector.broadcast %cst_85 : f32 to vector<16x1xf32>
      %279 = arith.mulf %277, %278 : vector<16x1xf32>
      %280 = math.sqrt %279 : vector<16x1xf32>
      %cst_86 = arith.constant 9.99999997E-7 : f32
      %281 = vector.broadcast %cst_86 : f32 to vector<16x1xf32>
      %282 = arith.addf %280, %281 : vector<16x1xf32>
      %283 = tpu.reciprocal %282 {approx = true} : vector<16x1xf32> -> vector<16x1xf32>
      %284 = vector.broadcast %272 : vector<16x1xf32> to vector<16x32xf32>
      %285 = arith.subf %261, %284 : vector<16x32xf32>
      %286 = vector.broadcast %267 : vector<1x32xf32> to vector<16x32xf32>
      %287 = arith.mulf %286, %285 : vector<16x32xf32>
      %288 = vector.broadcast %283 : vector<16x1xf32> to vector<16x32xf32>
      %289 = arith.mulf %287, %288 : vector<16x32xf32>
      %290 = vector.broadcast %268 : vector<1x32xf32> to vector<16x32xf32>
      %291 = arith.addf %289, %290 : vector<16x32xf32>
      %c0_87 = arith.constant 0 : index
      %c0_88 = arith.constant 0 : index
      %292 = vector.load %arg10[%c0_87, %c0_88] : memref<16x32xf32, #tpu.memory_space<vmem>>, vector<16x32xf32>
      tpu.vector_store %arg10[%c0_87, %c0_88], %291 {strides = array<i32>} : memref<16x32xf32, #tpu.memory_space<vmem>>, vector<16x32xf32>,
    } else {
    }
    return
  }
  func.func @transform_0(%arg0: i32) -> (i32, i32) {
    %c0_i32 = arith.constant 0 : i32
    %c0_i32_0 = arith.constant 0 : i32
    %c0_i32_1 = arith.constant 0 : i32
    return %c0_i32, %c0_i32_0 : i32, i32
  }
  func.func @transform_1(%arg0: i32) -> (i32, i32) {
    %c0_i32 = arith.constant 0 : i32
    %c0_i32_0 = arith.constant 0 : i32
    %c0_i32_1 = arith.constant 0 : i32
    return %c0_i32, %c0_i32_0 : i32, i32
  }
  func.func @transform_2(%arg0: i32) -> (i32, i32, i32) {
    %c0_i32 = arith.constant 0 : i32
    %c0_i32_0 = arith.constant 0 : i32
    %c0_i32_1 = arith.constant 0 : i32
    %c0_i32_2 = arith.constant 0 : i32
    return %c0_i32, %c0_i32_0, %c0_i32_1 : i32, i32, i32
  }
  func.func @transform_3(%arg0: i32) -> (i32, i32, i32) {
    %c0_i32 = arith.constant 0 : i32
    %c0_i32_0 = arith.constant 0 : i32
    %c0_i32_1 = arith.constant 0 : i32
    %c0_i32_2 = arith.constant 0 : i32
    return %c0_i32, %c0_i32_0, %c0_i32_1 : i32, i32, i32
  }
  func.func @transform_4(%arg0: i32) -> (i32, i32, i32, i32) {
    %c0_i32 = arith.constant 0 : i32
    %c0_i32_0 = arith.constant 0 : i32
    %c0_i32_1 = arith.constant 0 : i32
    %c0_i32_2 = arith.constant 0 : i32
    return %arg0, %c0_i32, %c0_i32_0, %c0_i32_1 : i32, i32, i32, i32
  }
  func.func @transform_5(%arg0: i32) -> (i32, i32, i32) {
    %c0_i32 = arith.constant 0 : i32
    %c0_i32_0 = arith.constant 0 : i32
    %c0_i32_1 = arith.constant 0 : i32
    return %arg0, %c0_i32, %c0_i32_0 : i32, i32, i32
  }
  func.func @transform_6(%arg0: i32) -> (i32, i32, i32) {
    %c0_i32 = arith.constant 0 : i32
    %c0_i32_0 = arith.constant 0 : i32
    %c0_i32_1 = arith.constant 0 : i32
    return %arg0, %c0_i32, %c0_i32_0 : i32, i32, i32
  }
  func.func @transform_7(%arg0: i32) -> (i32, i32, i32) {
    %c0_i32 = arith.constant 0 : i32
    %c0_i32_0 = arith.constant 0 : i32
    %c0_i32_1 = arith.constant 0 : i32
    return %arg0, %c0_i32, %c0_i32_0 : i32, i32, i32
  }
  func.func @transform_8(%arg0: i32) -> (i32, i32) {
    %c0_i32 = arith.constant 0 : i32
    %c0_i32_0 = arith.constant 0 : i32
    %c0_i32_1 = arith.constant 0 : i32
    return %c0_i32, %c0_i32_0 : i32, i32
  }
  func.func @transform_9(%arg0: i32) -> (i32, i32) {
    %c0_i32 = arith.constant 0 : i32
    %c0_i32_0 = arith.constant 0 : i32
    %c0_i32_1 = arith.constant 0 : i32
    return %c0_i32, %c0_i32_0 : i32, i32
  }
}

</mosaic_0001>

<llo_original>
// kernel: tpu_custom_call.1
$region0: #{tpu_custom_call.1}
  #allocation0 [shape = 'u32[]', space=smem, size = 0x4, offset = 0x4, fixed_abs, tag = 'smem constant byte address 0x4 - core index']
  #allocation1 [shape = 'u32[72,128]{1,0:T(1,128)}', space=vmem, size = 0x9000, scoped, tag = 'internal scratch']
  %s0 = inlined_call_operand.vmem [shape: f32[16,32], index: 0, kind: input, shape index: {}]
  %s1 = inlined_call_operand.vmem [shape: f32[16,32], index: 1, kind: input, shape index: {}]
  %s2 = inlined_call_operand.vmem [shape: f32[2,8,8], index: 2, kind: input, shape index: {}]
  %s3 = inlined_call_operand.vmem [shape: f32[2,8,8], index: 3, kind: input, shape index: {}]
  %s4 = inlined_call_operand.vmem [shape: f32[2,2,32,128], index: 4, kind: input, shape index: {}]
  %s5 = inlined_call_operand.vmem [shape: f32[2,6,32], index: 5, kind: input, shape index: {}]
  %s6 = inlined_call_operand.vmem [shape: f32[2,33,64], index: 6, kind: input, shape index: {}]
  %s7 = inlined_call_operand.vmem [shape: f32[2,65,32], index: 7, kind: input, shape index: {}]
  %s8 = inlined_call_operand.vmem [shape: f32[2,32], index: 8, kind: input, shape index: {}]
  %s9 = inlined_call_operand.hbm [shape: f32[16,32], index: 9, kind: output, shape index: {}]
  %s10 = sld [smem:[#allocation0]]
  $region77: #{tpu_custom_call.1} parent=0
    _
  %s12 = ssub.s32 1, %s10
  %s13 = scalar_select 0, %s12, %s10
  $region1: #{tpu_custom_call.1} parent=0
    #allocation2 [shape = 'u8[8192]{0}', space=vmem, size = 0x2000, scoped, tag = 'output window, operand 0, single buffered']
    #allocation3 [shape = 's32[2]{0}', space=sflag, size = 0x8, scoped, tag = 'scoped memory for tpu_custom_call.1']
    %14 = vsyncpa [#allocation3], 0
    loop: start=0, step=1, limit=4
    $region2: #{tpu_custom_call.1} parent=1 // loop_pre_header
      _
    $region3: #{tpu_custom_call.1} parent=1 // loop_header
      %s16 = sphi 0, %s20
      %p17 = scmp.ge.s32.totalorder %s16, 4
      %s24 = sphi 0, %s24
      %s26 = sphi 0, %s24
      %s27 = sphi 0, %s26
      %s41 = sphi 0, %s27
      %s45 = sphi 0, %s45
      %s47 = sphi 0, %s45
      %s48 = sphi 0, %s47
      %s62 = sphi 0, %s48
      %s66 = sphi 0, %s66
      %s68 = sphi 0, %s66
      %s69 = sphi 0, %s68
      %s83 = sphi 0, %s69
      %s87 = sphi 0, %s87
      %s89 = sphi 0, %s87
      %s90 = sphi 0, %s89
      %s104 = sphi 0, %s90
      %s110 = sphi 0, %s112
      %s113 = sphi 0, %s110
      %s114 = sphi 0, %s113
      %s130 = sphi 0, %s114
      %s136 = sphi 0, %s138
      %s139 = sphi 0, %s136
      %s140 = sphi 0, %s139
      %s156 = sphi 0, %s140
      %s162 = sphi 0, %s164
      %s165 = sphi 0, %s162
      %s166 = sphi 0, %s165
      %s182 = sphi 0, %s166
      %s188 = sphi 0, %s190
      %s191 = sphi 0, %s188
      %s192 = sphi 0, %s191
      %s208 = sphi 0, %s192
      %s212 = sphi 0, %s212
      %s214 = sphi 0, %s212
      %s215 = sphi 0, %s214
      %s229 = sphi 0, %s215
      %s233 = sphi 0, %s233
      %s235 = sphi 0, %s233
      %s236 = sphi 0, %s235
      %s250 = sphi 0, %s236
    $region4: #{tpu_custom_call.1} parent=1 // loop_header_branch
      %19 = sbr.rel (%p17) target = $region8
    $region5: #{tpu_custom_call.1} parent=1 // loop_body
      %s21 = ssub.s32 %s16, 1
      %s22 = ssub.s32 %s16, 2
      %s23 = sadd.s32 %s16, 1
      %s25 = sadd.s32 %s24, 1
      %p28 = scmp.eq.s32.totalorder %s16, 1
      %p29 = scmp.ne.s32.totalorder %s24, %s26
      %p30 = scmp.eq.s32.totalorder %s16, 0
      %p31 = por %p29, %p30
      %p32 = scmp.ne.s32.totalorder %s24, %s26
      %p33 = scmp.eq.s32.totalorder %s21, 1
      %p34 = por %p32, %p33
      %p35 = scmp.ne.s32.totalorder %s26, %s27
      %p36 = scmp.eq.s32.totalorder %s21, 0
      %p37 = por %p35, %p36
      %p38 = scmp.ne.s32.totalorder %s26, %s27
      %p39 = scmp.eq.s32.totalorder %s22, 1
      %p40 = por %p38, %p39
      %p42 = scmp.ne.s32.totalorder %s27, %s41
      %p43 = scmp.eq.s32.totalorder %s22, 0
      %p44 = por %p42, %p43
      %s46 = sadd.s32 %s45, 1
      %p49 = scmp.eq.s32.totalorder %s16, 1
      %p50 = scmp.ne.s32.totalorder %s45, %s47
      %p51 = scmp.eq.s32.totalorder %s16, 0
      %p52 = por %p50, %p51
      %p53 = scmp.ne.s32.totalorder %s45, %s47
      %p54 = scmp.eq.s32.totalorder %s21, 1
      %p55 = por %p53, %p54
      %p56 = scmp.ne.s32.totalorder %s47, %s48
      %p57 = scmp.eq.s32.totalorder %s21, 0
      %p58 = por %p56, %p57
      %p59 = scmp.ne.s32.totalorder %s47, %s48
      %p60 = scmp.eq.s32.totalorder %s22, 1
      %p61 = por %p59, %p60
      %p63 = scmp.ne.s32.totalorder %s48, %s62
      %p64 = scmp.eq.s32.totalorder %s22, 0
      %p65 = por %p63, %p64
      %s67 = sadd.s32 %s66, 1
      %p70 = scmp.eq.s32.totalorder %s16, 1
      %p71 = scmp.ne.s32.totalorder %s66, %s68
      %p72 = scmp.eq.s32.totalorder %s16, 0
      %p73 = por %p71, %p72
      %p74 = scmp.ne.s32.totalorder %s66, %s68
      %p75 = scmp.eq.s32.totalorder %s21, 1
      %p76 = por %p74, %p75
      %p77 = scmp.ne.s32.totalorder %s68, %s69
      %p78 = scmp.eq.s32.totalorder %s21, 0
      %p79 = por %p77, %p78
      %p80 = scmp.ne.s32.totalorder %s68, %s69
      %p81 = scmp.eq.s32.totalorder %s22, 1
      %p82 = por %p80, %p81
      %p84 = scmp.ne.s32.totalorder %s69, %s83
      %p85 = scmp.eq.s32.totalorder %s22, 0
      %p86 = por %p84, %p85
      %s88 = sadd.s32 %s87, 1
      %p91 = scmp.eq.s32.totalorder %s16, 1
      %p92 = scmp.ne.s32.totalorder %s87, %s89
      %p93 = scmp.eq.s32.totalorder %s16, 0
      %p94 = por %p92, %p93
      %p95 = scmp.ne.s32.totalorder %s87, %s89
      %p96 = scmp.eq.s32.totalorder %s21, 1
      %p97 = por %p95, %p96
      %p98 = scmp.ne.s32.totalorder %s89, %s90
      %p99 = scmp.eq.s32.totalorder %s21, 0
      %p100 = por %p98, %p99
      %p101 = scmp.ne.s32.totalorder %s89, %s90
      %p102 = scmp.eq.s32.totalorder %s22, 1
      %p103 = por %p101, %p102
      %p105 = scmp.ne.s32.totalorder %s90, %s104
      %p106 = scmp.eq.s32.totalorder %s22, 0
      %p107 = por %p105, %p106
      %s108 = ssub.s32 %s16, %s23
      %p109 = scmp.eq.s32.totalorder %s108, 0
      %s111 = sadd.s32 %s110, 1
      %s112 = scalar_select %p109, %s110, %s111
      %p115 = pneg %p109
      %p116 = scmp.eq.s32.totalorder %s16, 1
      %p117 = por %p115, %p116
      %p118 = scmp.ne.s32.totalorder %s110, %s113
      %p119 = scmp.eq.s32.totalorder %s16, 0
      %p120 = por %p118, %p119
      %p121 = scmp.ne.s32.totalorder %s110, %s113
      %p122 = scmp.eq.s32.totalorder %s21, 1
      %p123 = por %p121, %p122
      %p124 = scmp.ne.s32.totalorder %s113, %s114
      %p125 = scmp.eq.s32.totalorder %s21, 0
      %p126 = por %p124, %p125
      %p127 = scmp.ne.s32.totalorder %s113, %s114
      %p128 = scmp.eq.s32.totalorder %s22, 1
      %p129 = por %p127, %p128
      %p131 = scmp.ne.s32.totalorder %s114, %s130
      %p132 = scmp.eq.s32.totalorder %s22, 0
      %p133 = por %p131, %p132
      %s134 = ssub.s32 %s16, %s23
      %p135 = scmp.eq.s32.totalorder %s134, 0
      %s137 = sadd.s32 %s136, 1
      %s138 = scalar_select %p135, %s136, %s137
      %p141 = pneg %p135
      %p142 = scmp.eq.s32.totalorder %s16, 1
      %p143 = por %p141, %p142
      %p144 = scmp.ne.s32.totalorder %s136, %s139
      %p145 = scmp.eq.s32.totalorder %s16, 0
      %p146 = por %p144, %p145
      %p147 = scmp.ne.s32.totalorder %s136, %s139
      %p148 = scmp.eq.s32.totalorder %s21, 1
      %p149 = por %p147, %p148
      %p150 = scmp.ne.s32.totalorder %s139, %s140
      %p151 = scmp.eq.s32.totalorder %s21, 0
      %p152 = por %p150, %p151
      %p153 = scmp.ne.s32.totalorder %s139, %s140
      %p154 = scmp.eq.s32.totalorder %s22, 1
      %p155 = por %p153, %p154
      %p157 = scmp.ne.s32.totalorder %s140, %s156
      %p158 = scmp.eq.s32.totalorder %s22, 0
      %p159 = por %p157, %p158
      %s160 = ssub.s32 %s16, %s23
      %p161 = scmp.eq.s32.totalorder %s160, 0
      %s163 = sadd.s32 %s162, 1
      %s164 = scalar_select %p161, %s162, %s163
      %p167 = pneg %p161
      %p168 = scmp.eq.s32.totalorder %s16, 1
      %p169 = por %p167, %p168
      %p170 = scmp.ne.s32.totalorder %s162, %s165
      %p171 = scmp.eq.s32.totalorder %s16, 0
      %p172 = por %p170, %p171
      %p173 = scmp.ne.s32.totalorder %s162, %s165
      %p174 = scmp.eq.s32.totalorder %s21, 1
      %p175 = por %p173, %p174
      %p176 = scmp.ne.s32.totalorder %s165, %s166
      %p177 = scmp.eq.s32.totalorder %s21, 0
      %p178 = por %p176, %p177
      %p179 = scmp.ne.s32.totalorder %s165, %s166
      %p180 = scmp.eq.s32.totalorder %s22, 1
      %p181 = por %p179, %p180
      %p183 = scmp.ne.s32.totalorder %s166, %s182
      %p184 = scmp.eq.s32.totalorder %s22, 0
      %p185 = por %p183, %p184
      %s186 = ssub.s32 %s16, %s23
      %p187 = scmp.eq.s32.totalorder %s186, 0
      %s189 = sadd.s32 %s188, 1
      %s190 = scalar_select %p187, %s188, %s189
      %p193 = pneg %p187
      %p194 = scmp.eq.s32.totalorder %s16, 1
      %p195 = por %p193, %p194
      %p196 = scmp.ne.s32.totalorder %s188, %s191
      %p197 = scmp.eq.s32.totalorder %s16, 0
      %p198 = por %p196, %p197
      %p199 = scmp.ne.s32.totalorder %s188, %s191
      %p200 = scmp.eq.s32.totalorder %s21, 1
      %p201 = por %p199, %p200
      %p202 = scmp.ne.s32.totalorder %s191, %s192
      %p203 = scmp.eq.s32.totalorder %s21, 0
      %p204 = por %p202, %p203
      %p205 = scmp.ne.s32.totalorder %s191, %s192
      %p206 = scmp.eq.s32.totalorder %s22, 1
      %p207 = por %p205, %p206
      %p209 = scmp.ne.s32.totalorder %s192, %s208
      %p210 = scmp.eq.s32.totalorder %s22, 0
      %p211 = por %p209, %p210
      %s213 = sadd.s32 %s212, 1
      %p216 = scmp.eq.s32.totalorder %s16, 1
      %p217 = scmp.ne.s32.totalorder %s212, %s214
      %p218 = scmp.eq.s32.totalorder %s16, 0
      %p219 = por %p217, %p218
      %p220 = scmp.ne.s32.totalorder %s212, %s214
      %p221 = scmp.eq.s32.totalorder %s21, 1
      %p222 = por %p220, %p221
      %p223 = scmp.ne.s32.totalorder %s214, %s215
      %p224 = scmp.eq.s32.totalorder %s21, 0
      %p225 = por %p223, %p224
      %p226 = scmp.ne.s32.totalorder %s214, %s215
      %p227 = scmp.eq.s32.totalorder %s22, 1
      %p228 = por %p226, %p227
      %p230 = scmp.ne.s32.totalorder %s215, %s229
      %p231 = scmp.eq.s32.totalorder %s22, 0
      %p232 = por %p230, %p231
      %s234 = sadd.s32 %s233, 1
      %p237 = scmp.eq.s32.totalorder %s16, 1
      %p238 = scmp.ne.s32.totalorder %s233, %s235
      %p239 = scmp.eq.s32.totalorder %s16, 0
      %p240 = por %p238, %p239
      %p241 = scmp.ne.s32.totalorder %s233, %s235
      %p242 = scmp.eq.s32.totalorder %s21, 1
      %p243 = por %p241, %p242
      %p244 = scmp.ne.s32.totalorder %s235, %s236
      %p245 = scmp.eq.s32.totalorder %s21, 0
      %p246 = por %p244, %p245
      %p247 = scmp.ne.s32.totalorder %s235, %s236
      %p248 = scmp.eq.s32.totalorder %s22, 1
      %p249 = por %p247, %p248
      %p251 = scmp.ne.s32.totalorder %s236, %s250
      %p252 = scmp.eq.s32.totalorder %s22, 0
      %p253 = por %p251, %p252
      %p254 = scmp.le.s32.totalorder 1, %s16
      %p255 = scmp.lt.s32.totalorder %s16, 3
      %p256 = pnand %p254, %p255
      %p257 = pneg %p256
      // Predicated region
      $region9: #{tpu_custom_call.1} parent=5 // pred_check
        _
      $region10: #{tpu_custom_call.1} parent=5 // pred_check_branch
        %259 = sbr.rel (%p256) target = $region12
      $region11: #{tpu_custom_call.1} parent=5 // pred_region
        %s260 = ssub.s32 %s16, 1
        // Predicated region
        $region13: #{tpu_custom_call.1} parent=11 // pred_check
          %p261 = pneg %p37
        $region14: #{tpu_custom_call.1} parent=11 // pred_check_branch
          %263 = sbr.rel (%p261) target = $region16
        $region15: #{tpu_custom_call.1} parent=11 // pred_region
          _
        $region16: #{tpu_custom_call.1} parent=11 // pred_fallthru
          _
        // Predicated region
        $region17: #{tpu_custom_call.1} parent=11 // pred_check
          %p264 = pneg %p58
        $region18: #{tpu_custom_call.1} parent=11 // pred_check_branch
          %266 = sbr.rel (%p264) target = $region20
        $region19: #{tpu_custom_call.1} parent=11 // pred_region
          _
        $region20: #{tpu_custom_call.1} parent=11 // pred_fallthru
          _
        // Predicated region
        $region21: #{tpu_custom_call.1} parent=11 // pred_check
          %p267 = pneg %p79
        $region22: #{tpu_custom_call.1} parent=11 // pred_check_branch
          %269 = sbr.rel (%p267) target = $region24
        $region23: #{tpu_custom_call.1} parent=11 // pred_region
          _
        $region24: #{tpu_custom_call.1} parent=11 // pred_fallthru
          _
        // Predicated region
        $region25: #{tpu_custom_call.1} parent=11 // pred_check
          %p270 = pneg %p100
        $region26: #{tpu_custom_call.1} parent=11 // pred_check_branch
          %272 = sbr.rel (%p270) target = $region28
        $region27: #{tpu_custom_call.1} parent=11 // pred_region
          _
        $region28: #{tpu_custom_call.1} parent=11 // pred_fallthru
          _
        // Predicated region
        $region29: #{tpu_custom_call.1} parent=11 // pred_check
          %p273 = pneg %p225
        $region30: #{tpu_custom_call.1} parent=11 // pred_check_branch
          %275 = sbr.rel (%p273) target = $region32
        $region31: #{tpu_custom_call.1} parent=11 // pred_region
          _
        $region32: #{tpu_custom_call.1} parent=11 // pred_fallthru
          _
      $region12: #{tpu_custom_call.1} parent=5 // pred_fallthru
        _
      %p276 = scmp.lt.s32.totalorder %s16, 2
      // Predicated region
      $region33: #{tpu_custom_call.1} parent=5 // pred_check
        %p277 = pneg %p276
      $region34: #{tpu_custom_call.1} parent=5 // pred_check_branch
        %279 = sbr.rel (%p277) target = $region36
      $region35: #{tpu_custom_call.1} parent=5 // pred_region
        // Predicated region
        $region37: #{tpu_custom_call.1} parent=35 // pred_check
          %p280 = pneg %p120
        $region38: #{tpu_custom_call.1} parent=35 // pred_check_branch
          %282 = sbr.rel (%p280) target = $region40
        $region39: #{tpu_custom_call.1} parent=35 // pred_region
          %p283 = scmp.lt.s32.totalorder %s16, 1
          %s284 = scalar_select %p283, %s16, 1
          %s285 = smul.addr %s284, 8
          %s286 = smul.addr %s285, 8
          %s287 = scalar_lea.vmem %s4, %s286
        $region40: #{tpu_custom_call.1} parent=35 // pred_fallthru
          _
        // Predicated region
        $region41: #{tpu_custom_call.1} parent=35 // pred_check
          %p288 = pneg %p146
        $region42: #{tpu_custom_call.1} parent=35 // pred_check_branch
          %290 = sbr.rel (%p288) target = $region44
        $region43: #{tpu_custom_call.1} parent=35 // pred_region
          %p291 = scmp.lt.s32.totalorder %s16, 1
          %s292 = scalar_select %p291, %s16, 1
          %s293 = smul.addr %s292, 8
          %s294 = scalar_lea.vmem %s5, %s293
        $region44: #{tpu_custom_call.1} parent=35 // pred_fallthru
          _
        // Predicated region
        $region45: #{tpu_custom_call.1} parent=35 // pred_check
          %p295 = pneg %p172
        $region46: #{tpu_custom_call.1} parent=35 // pred_check_branch
          %297 = sbr.rel (%p295) target = $region48
        $region47: #{tpu_custom_call.1} parent=35 // pred_region
          %p298 = scmp.lt.s32.totalorder %s16, 1
          %s299 = scalar_select %p298, %s16, 1
          %s300 = smul.addr %s299, 5
          %s301 = smul.addr %s300, 8
          %s302 = scalar_lea.vmem %s6, %s301
        $region48: #{tpu_custom_call.1} parent=35 // pred_fallthru
          _
        // Predicated region
        $region49: #{tpu_custom_call.1} parent=35 // pred_check
          %p303 = pneg %p198
        $region50: #{tpu_custom_call.1} parent=35 // pred_check_branch
          %305 = sbr.rel (%p303) target = $region52
        $region51: #{tpu_custom_call.1} parent=35 // pred_region
          %p306 = scmp.lt.s32.totalorder %s16, 1
          %s307 = scalar_select %p306, %s16, 1
          %s308 = smul.addr %s307, 9
          %s309 = smul.addr %s308, 8
          %s310 = scalar_lea.vmem %s7, %s309
        $region52: #{tpu_custom_call.1} parent=35 // pred_fallthru
          _
      $region36: #{tpu_custom_call.1} parent=5 // pred_fallthru
        _
      %p311 = scmp.le.s32.totalorder 1, %s16
      %p312 = scmp.lt.s32.totalorder %s16, 3
      %p313 = pnand %p311, %p312
      %p314 = pneg %p313
      // Predicated region
      $region53: #{tpu_custom_call.1} parent=5 // pred_check
        _
      $region54: #{tpu_custom_call.1} parent=5 // pred_check_branch
        %316 = sbr.rel (%p313) target = $region56
      $region55: #{tpu_custom_call.1} parent=5 // pred_region
        %s317 = ssub.s32 %s16, 1
        %p318 = pneg %p37
        %p319 = pneg %p34
        %p320 = pneg %p58
        %p321 = pneg %p55
        %p322 = pneg %p79
        %p323 = pneg %p76
        %p324 = pneg %p100
        %p325 = pneg %p97
        %p326 = scmp.lt.s32.totalorder %s21, 1
        %s327 = scalar_select %p326, %s21, 1
        %s328 = smul.addr %s327, 8
        %s329 = smul.addr %s328, 8
        %s330 = scalar_lea.vmem %s4, %s329
        %p331 = pneg %p126
        %p332 = pneg %p123
        %p333 = scmp.lt.s32.totalorder %s21, 1
        %s334 = scalar_select %p333, %s21, 1
        %s335 = smul.addr %s334, 8
        %s336 = scalar_lea.vmem %s5, %s335
        %p337 = pneg %p152
        %p338 = pneg %p149
        %p339 = scmp.lt.s32.totalorder %s21, 1
        %s340 = scalar_select %p339, %s21, 1
        %s341 = smul.addr %s340, 5
        %s342 = smul.addr %s341, 8
        %s343 = scalar_lea.vmem %s6, %s342
        %p344 = pneg %p178
        %p345 = pneg %p175
        %p346 = scmp.lt.s32.totalorder %s21, 1
        %s347 = scalar_select %p346, %s21, 1
        %s348 = smul.addr %s347, 9
        %s349 = smul.addr %s348, 8
        %s350 = scalar_lea.vmem %s7, %s349
        %p351 = pneg %p204
        %p352 = pneg %p201
        %p353 = pneg %p225
        %p354 = pneg %p222
        %p355 = pneg %p246
        %p356 = pneg %p243
        %p357 = scmp.lt.s32.totalorder %s21, 1
        %s358 = scalar_select %p357, %s21, 1
        %s359 = smul.addr %s358, 8
        %s360 = smul.addr %s359, 8
        %s361 = scalar_lea.vmem %s4, %s360
        %p362 = scmp.lt.s32.totalorder %s21, 1
        %s363 = scalar_select %p362, %s21, 1
        %s364 = smul.addr %s363, 8
        %s365 = scalar_lea.vmem %s5, %s364
        %p366 = scmp.lt.s32.totalorder %s21, 1
        %s367 = scalar_select %p366, %s21, 1
        %s368 = smul.addr %s367, 5
        %s369 = smul.addr %s368, 8
        %s370 = scalar_lea.vmem %s6, %s369
        %p371 = scmp.lt.s32.totalorder %s21, 1
        %s372 = scalar_select %p371, %s21, 1
        %s373 = smul.addr %s372, 9
        %s374 = smul.addr %s373, 8
        %s375 = scalar_lea.vmem %s7, %s374
        %p376 = scmp.eq.s32.totalorder %s21, 0
        // Predicated region
        $region57: #{tpu_custom_call.1} parent=55 // pred_check
          %p377 = pneg %p376
        $region58: #{tpu_custom_call.1} parent=55 // pred_check_branch
          %379 = sbr.rel (%p377) target = $region60
        $region59: #{tpu_custom_call.1} parent=55 // pred_region
          %v380 = vld [vmem:[%s0] sm:$0xff]
          %v381 = vld [vmem:[%s0 + $0x8] sm:$0xff]
          %vm382 = vcmask 261120
          %383 = vst.msk [vmem:[#allocation2] sm:$0xff] %vm382, %v380
          %384 = vst.msk [vmem:[#allocation2 + $0x8] sm:$0xff] %vm382, %v381
        $region60: #{tpu_custom_call.1} parent=55 // pred_fallthru
          _
        %v385 = vld [vmem:[#allocation2] sm:$0xff]
        %v386 = vld [vmem:[#allocation2 + $0x8] sm:$0xff]
        %v387 = vld [vmem:[%s1] sm:$0xff]
        %v388 = vld [vmem:[%s1 + $0x8] sm:$0xff]
        %v389 = vld [vmem:[%s2] sm:$0xff]
        %v390 = vld [vmem:[%s2 + $0x8] sm:$0xff]
        %v391 = vld [vmem:[%s3] sm:$0xff]
        %v392 = vld [vmem:[%s3 + $0x8] sm:$0xff]
        %v393 = vld [vmem:[%s361] sm:$0xff]
        %v394 = vld [vmem:[%s361 + $0x8] sm:$0xff]
        %v395 = vld [vmem:[%s361 + $0x10] sm:$0xff]
        %v396 = vld [vmem:[%s361 + $0x18] sm:$0xff]
        %v397 = vld [vmem:[%s361 + $0x20] sm:$0xff]
        %v398 = vld [vmem:[%s361 + $0x28] sm:$0xff]
        %v399 = vld [vmem:[%s361 + $0x30] sm:$0xff]
        %v400 = vld [vmem:[%s361 + $0x38] sm:$0xff]
        %v401 = vld [vmem:[%s365] sm:$0x3f]
        %v402 = vld [vmem:[%s370] sm:$0xff]
        %v403 = vld [vmem:[%s370 + $0x8] sm:$0xff]
        %v404 = vld [vmem:[%s370 + $0x10] sm:$0xff]
        %v405 = vld [vmem:[%s370 + $0x18] sm:$0xff]
        %v406 = vld [vmem:[%s370 + $0x20] sm:$0x1]
        %v407 = vld [vmem:[%s375] sm:$0xff]
        %v408 = vld [vmem:[%s375 + $0x8] sm:$0xff]
        %v409 = vld [vmem:[%s375 + $0x10] sm:$0xff]
        %v410 = vld [vmem:[%s375 + $0x18] sm:$0xff]
        %v411 = vld [vmem:[%s375 + $0x20] sm:$0xff]
        %v412 = vld [vmem:[%s375 + $0x28] sm:$0xff]
        %v413 = vld [vmem:[%s375 + $0x30] sm:$0xff]
        %v414 = vld [vmem:[%s375 + $0x38] sm:$0xff]
        %v415 = vld [vmem:[%s375 + $0x40] sm:$0x1]
        %vm416 = vcmask 261120
        %v417 = vsel %vm416, %v385, 0.0
        %418 = vadd.xlane.f32.xlu0 %v417
        %v419 = vpop.xlane.xlu0 %418
        %v420 = vsel %vm416, %v386, 0.0
        %421 = vadd.xlane.f32.xlu0 %v420
        %v422 = vpop.xlane.xlu0 %421
        %v423 = vrcp.pop 32.0
        %v424 = vmul.f32 32.0, %v423
        %v425 = vsub.f32 1.0, %v424
        %v426 = vmul.f32 %v423, %v425
        %v427 = vadd.f32 %v423, %v426
        %vm428 = vweird.f32 %v423
        %v429 = vsel %vm428, %v423, %v427
        %v430 = vmul.f32 %v419, %v429
        %v431 = vmul.f32 %v422, %v429
        %v432 = vsub.f32 %v385, %v430
        %v433 = vsub.f32 %v386, %v431
        %v434 = vmul.f32 %v432, %v432
        %v435 = vmul.f32 %v433, %v433
        %v436 = vsel %vm416, %v434, 0.0
        %437 = vadd.xlane.f32.xlu0 %v436
        %v438 = vpop.xlane.xlu0 %437
        %v439 = vsel %vm416, %v435, 0.0
        %440 = vadd.xlane.f32.xlu0 %v439
        %v441 = vpop.xlane.xlu0 %440
        %v442 = vmul.f32 %v438, 0.032258064
        %v443 = vmul.f32 %v441, 0.032258064
        %v444 = vrsqrt.pop %v442
        %v445 = vmul.f32 %v444, %v442
        %v446 = vmul.f32 %v445, %v444
        %v447 = vmul.f32 0.5, %v446
        %v448 = vsub.f32 1.5, %v447
        %v449 = vmul.f32 %v444, %v448
        %v450 = vmul.f32 %v442, %v449
        %vm451 = vcmp.eq.f32.partialorder %v442, inf
        %v452 = vsel %vm451, %v442, %v450
        %vm453 = vcmp.eq.f32.partialorder %v442, 0.0
        %v454 = vand.u32 %v442, 2147483648
        %v455 = vsel %vm453, %v454, %v452
        %v456 = vrsqrt.pop %v443
        %v457 = vmul.f32 %v456, %v443
        %v458 = vmul.f32 %v457, %v456
        %v459 = vmul.f32 0.5, %v458
        %v460 = vsub.f32 1.5, %v459
        %v461 = vmul.f32 %v456, %v460
        %v462 = vmul.f32 %v443, %v461
        %vm463 = vcmp.eq.f32.partialorder %v443, inf
        %v464 = vsel %vm463, %v443, %v462
        %vm465 = vcmp.eq.f32.partialorder %v443, 0.0
        %v466 = vand.u32 %v443, 2147483648
        %v467 = vsel %vm465, %v466, %v464
        %v468 = vadd.f32 %v455, 1e-06
        %v469 = vadd.f32 %v467, 1e-06
        %v470 = vrcp.pop %v468
        %v471 = vrcp.pop %v469
        %v472 = vperm.slane %v401, 0
        %v473 = vmul.f32 %v472, %v432
        %v474 = vmul.f32 %v472, %v433
        %v475 = vmul.f32 %v473, %v470
        %v476 = vmul.f32 %v474, %v471
        %v477 = vperm.slane %v401, 1
        %v478 = vadd.f32 %v475, %v477
        %v479 = vadd.f32 %v476, %v477
        %v481 = vsel %vm416, %v478, 0
        %v484 = vsel %vm416, %v479, 0
        %486 = vmatpush.msra.mxu0 0.0
        %487 = vmatpush.msra.mxu0 0.0
        %488 = vmatpush.msra.mxu0 0.0
        %489 = vmatpush.msra.mxu0 0.0
        %490 = vmatpush.msra.mxu0 0.0
        %491 = vmatpush.msra.mxu0 0.0
        %492 = vmatpush.msra.mxu0 0.0
        %493 = vmatpush.msra.mxu0 0.0
        %494 = vmatpush.msra.mxu0 0.0
        %495 = vmatpush.msra.mxu0 0.0
        %496 = vmatpush.msra.mxu0 0.0
        %497 = vmatpush.msra.mxu0 0.0
        %498 = vmatpush.msra.mxu0 %v396
        %499 = vmatpush.msra.mxu0 %v395
        %500 = vmatpush.msra.mxu0 %v394
        %501 = vmatpush.msra.mxu0 %v393
        %502 = vmatmul.f32.gmra.mxu0 %v481
        %v503 = vpop.f32.mrf.mxu0
        %v504 = vadd.f32 0.0, %v503
        %505 = vmatmul.f32.gmra.mxu0 %v484
        %v506 = vpop.f32.mrf.mxu0
        %v507 = vadd.f32 0.0, %v506
        %508 = vdwg.mxu0
        %510 = vrot.lane.b32.xlu0 %v504, 96
        %v511 = vpop.permute.xlu0 %510
        %vm512 = vcmask 64512
        %v513 = vsel %vm512, %v504, 0
        %v515 = vsel %vm512, %v511, 0
        %517 = vmatpush.xpose.msra.mxu0 0.0
        %518 = vmatpush.xpose.msra.mxu0 0.0
        %519 = vmatpush.xpose.msra.mxu0 0.0
        %520 = vmatpush.xpose.msra.mxu0 0.0
        %521 = vmatpush.xpose.msra.mxu0 0.0
        %522 = vmatpush.xpose.msra.mxu0 0.0
        %523 = vmatpush.xpose.msra.mxu0 0.0
        %524 = vmatpush.xpose.msra.mxu0 0.0
        %525 = vmatpush.xpose.msra.mxu0 0.0
        %526 = vmatpush.xpose.msra.mxu0 0.0
        %527 = vmatpush.xpose.msra.mxu0 0.0
        %528 = vmatpush.xpose.msra.mxu0 0.0
        %529 = vmatpush.xpose.msra.mxu0 0.0
        %530 = vmatpush.xpose.msra.mxu0 0.0
        %531 = vmatpush.xpose.msra.mxu0 0.0
        %532 = vmatpush.xpose.msra.mxu0 %v515
        %533 = vmatmul.f32.gmra.mxu0 %v513
        %v534 = vpop.f32.mrf.mxu0
        %v535 = vadd.f32 %v389, %v534
        %536 = vdwg.mxu0
        %538 = vrot.lane.b32.xlu0 %v507, 96
        %v539 = vpop.permute.xlu0 %538
        %v540 = vsel %vm512, %v507, 0
        %v542 = vsel %vm512, %v539, 0
        %544 = vmatpush.xpose.msra.mxu0 0.0
        %545 = vmatpush.xpose.msra.mxu0 0.0
        %546 = vmatpush.xpose.msra.mxu0 0.0
        %547 = vmatpush.xpose.msra.mxu0 0.0
        %548 = vmatpush.xpose.msra.mxu0 0.0
        %549 = vmatpush.xpose.msra.mxu0 0.0
        %550 = vmatpush.xpose.msra.mxu0 0.0
        %551 = vmatpush.xpose.msra.mxu0 0.0
        %552 = vmatpush.xpose.msra.mxu0 0.0
        %553 = vmatpush.xpose.msra.mxu0 0.0
        %554 = vmatpush.xpose.msra.mxu0 0.0
        %555 = vmatpush.xpose.msra.mxu0 0.0
        %556 = vmatpush.xpose.msra.mxu0 0.0
        %557 = vmatpush.xpose.msra.mxu0 0.0
        %558 = vmatpush.xpose.msra.mxu0 0.0
        %559 = vmatpush.xpose.msra.mxu0 %v542
        %560 = vmatmul.f32.gmra.mxu0 %v540
        %v561 = vpop.f32.mrf.mxu0
        %v562 = vadd.f32 %v390, %v561
        %563 = vdwg.mxu0
        %v564 = vsel %vm512, %v535, -inf
        %565 = vmax.xlane.f32.xlu0 %v564
        %v566 = vpop.xlane.xlu0 %565
        %v567 = vsel %vm512, %v562, -inf
        %568 = vmax.xlane.f32.xlu0 %v567
        %v569 = vpop.xlane.xlu0 %568
        %v570 = vsub.f32 %v535, %v566
        %v571 = vsub.f32 %v562, %v569
        %v572 = vmul.f32 %v570, 1.442695
        %v573 = vpow.pop %v572
        %v574 = vmul.f32 %v571, 1.442695
        %v575 = vpow.pop %v574
        %v576 = vsel %vm512, %v573, 0.0
        %577 = vadd.xlane.f32.xlu0 %v576
        %v578 = vpop.xlane.xlu0 %577
        %v579 = vsel %vm512, %v575, 0.0
        %580 = vadd.xlane.f32.xlu0 %v579
        %v581 = vpop.xlane.xlu0 %580
        %v582 = vrcp.pop %v578
        %v583 = vrcp.pop %v581
        %v584 = vmul.f32 %v573, %v582
        %v585 = vmul.f32 %v575, %v583
        %586 = vrot.lane.b32.xlu0 %v504, 64
        %v587 = vpop.permute.xlu0 %586
        %v590 = vsel %vm512, %v584, 0
        %592 = vmatpush.msra.mxu0 0.0
        %593 = vmatpush.msra.mxu0 0.0
        %594 = vmatpush.msra.mxu0 0.0
        %595 = vmatpush.msra.mxu0 0.0
        %596 = vmatpush.msra.mxu0 0.0
        %597 = vmatpush.msra.mxu0 0.0
        %598 = vmatpush.msra.mxu0 0.0
        %599 = vmatpush.msra.mxu0 0.0
        %600 = vmatpush.msra.mxu0 0.0
        %601 = vmatpush.msra.mxu0 0.0
        %602 = vmatpush.msra.mxu0 0.0
        %603 = vmatpush.msra.mxu0 0.0
        %604 = vmatpush.msra.mxu0 0.0
        %605 = vmatpush.msra.mxu0 0.0
        %606 = vmatpush.msra.mxu0 0.0
        %607 = vmatpush.msra.mxu0 %v587
        %608 = vmatmul.f32.gmra.mxu0 %v590
        %v609 = vpop.f32.mrf.mxu0
        %v610 = vadd.f32 0.0, %v609
        %611 = vdwg.mxu0
        %612 = vrot.lane.b32.xlu0 %v507, 64
        %v613 = vpop.permute.xlu0 %612
        %v616 = vsel %vm512, %v585, 0
        %618 = vmatpush.msra.mxu0 0.0
        %619 = vmatpush.msra.mxu0 0.0
        %620 = vmatpush.msra.mxu0 0.0
        %621 = vmatpush.msra.mxu0 0.0
        %622 = vmatpush.msra.mxu0 0.0
        %623 = vmatpush.msra.mxu0 0.0
        %624 = vmatpush.msra.mxu0 0.0
        %625 = vmatpush.msra.mxu0 0.0
        %626 = vmatpush.msra.mxu0 0.0
        %627 = vmatpush.msra.mxu0 0.0
        %628 = vmatpush.msra.mxu0 0.0
        %629 = vmatpush.msra.mxu0 0.0
        %630 = vmatpush.msra.mxu0 0.0
        %631 = vmatpush.msra.mxu0 0.0
        %632 = vmatpush.msra.mxu0 0.0
        %633 = vmatpush.msra.mxu0 %v613
        %634 = vmatmul.f32.gmra.mxu0 %v616
        %v635 = vpop.f32.mrf.mxu0
        %v636 = vadd.f32 0.0, %v635
        %637 = vdwg.mxu0
        %638 = vrot.lane.b32.xlu0 %v504, 120
        %v639 = vpop.permute.xlu0 %638
        %640 = vrot.lane.b32.xlu0 %v504, 88
        %v641 = vpop.permute.xlu0 %640
        %v642 = vsel %vm512, %v639, 0
        %v644 = vsel %vm512, %v641, 0
        %646 = vmatpush.xpose.msra.mxu0 0.0
        %647 = vmatpush.xpose.msra.mxu0 0.0
        %648 = vmatpush.xpose.msra.mxu0 0.0
        %649 = vmatpush.xpose.msra.mxu0 0.0
        %650 = vmatpush.xpose.msra.mxu0 0.0
        %651 = vmatpush.xpose.msra.mxu0 0.0
        %652 = vmatpush.xpose.msra.mxu0 0.0
        %653 = vmatpush.xpose.msra.mxu0 0.0
        %654 = vmatpush.xpose.msra.mxu0 0.0
        %655 = vmatpush.xpose.msra.mxu0 0.0
        %656 = vmatpush.xpose.msra.mxu0 0.0
        %657 = vmatpush.xpose.msra.mxu0 0.0
        %658 = vmatpush.xpose.msra.mxu0 0.0
        %659 = vmatpush.xpose.msra.mxu0 0.0
        %660 = vmatpush.xpose.msra.mxu0 0.0
        %661 = vmatpush.xpose.msra.mxu0 %v644
        %662 = vmatmul.f32.gmra.mxu0 %v642
        %v663 = vpop.f32.mrf.mxu0
        %v664 = vadd.f32 %v389, %v663
        %665 = vdwg.mxu0
        %666 = vrot.lane.b32.xlu0 %v507, 120
        %v667 = vpop.permute.xlu0 %666
        %668 = vrot.lane.b32.xlu0 %v507, 88
        %v669 = vpop.permute.xlu0 %668
        %v670 = vsel %vm512, %v667, 0
        %v672 = vsel %vm512, %v669, 0
        %674 = vmatpush.xpose.msra.mxu0 0.0
        %675 = vmatpush.xpose.msra.mxu0 0.0
        %676 = vmatpush.xpose.msra.mxu0 0.0
        %677 = vmatpush.xpose.msra.mxu0 0.0
        %678 = vmatpush.xpose.msra.mxu0 0.0
        %679 = vmatpush.xpose.msra.mxu0 0.0
        %680 = vmatpush.xpose.msra.mxu0 0.0
        %681 = vmatpush.xpose.msra.mxu0 0.0
        %682 = vmatpush.xpose.msra.mxu0 0.0
        %683 = vmatpush.xpose.msra.mxu0 0.0
        %684 = vmatpush.xpose.msra.mxu0 0.0
        %685 = vmatpush.xpose.msra.mxu0 0.0
        %686 = vmatpush.xpose.msra.mxu0 0.0
        %687 = vmatpush.xpose.msra.mxu0 0.0
        %688 = vmatpush.xpose.msra.mxu0 0.0
        %689 = vmatpush.xpose.msra.mxu0 %v672
        %690 = vmatmul.f32.gmra.mxu0 %v670
        %v691 = vpop.f32.mrf.mxu0
        %v692 = vadd.f32 %v390, %v691
        %693 = vdwg.mxu0
        %v694 = vsel %vm512, %v664, -inf
        %695 = vmax.xlane.f32.xlu0 %v694
        %v696 = vpop.xlane.xlu0 %695
        %v697 = vsel %vm512, %v692, -inf
        %698 = vmax.xlane.f32.xlu0 %v697
        %v699 = vpop.xlane.xlu0 %698
        %v700 = vsub.f32 %v664, %v696
        %v701 = vsub.f32 %v692, %v699
        %v702 = vmul.f32 %v700, 1.442695
        %v703 = vpow.pop %v702
        %v704 = vmul.f32 %v701, 1.442695
        %v705 = vpow.pop %v704
        %v706 = vsel %vm512, %v703, 0.0
        %707 = vadd.xlane.f32.xlu0 %v706
        %v708 = vpop.xlane.xlu0 %707
        %v709 = vsel %vm512, %v705, 0.0
        %710 = vadd.xlane.f32.xlu0 %v709
        %v711 = vpop.xlane.xlu0 %710
        %v712 = vrcp.pop %v708
        %v713 = vrcp.pop %v711
        %v714 = vmul.f32 %v703, %v712
        %v715 = vmul.f32 %v705, %v713
        %716 = vrot.lane.b32.xlu0 %v504, 56
        %v717 = vpop.permute.xlu0 %716
        %v720 = vsel %vm512, %v714, 0
        %722 = vmatpush.msra.mxu0 0.0
        %723 = vmatpush.msra.mxu0 0.0
        %724 = vmatpush.msra.mxu0 0.0
        %725 = vmatpush.msra.mxu0 0.0
        %726 = vmatpush.msra.mxu0 0.0
        %727 = vmatpush.msra.mxu0 0.0
        %728 = vmatpush.msra.mxu0 0.0
        %729 = vmatpush.msra.mxu0 0.0
        %730 = vmatpush.msra.mxu0 0.0
        %731 = vmatpush.msra.mxu0 0.0
        %732 = vmatpush.msra.mxu0 0.0
        %733 = vmatpush.msra.mxu0 0.0
        %734 = vmatpush.msra.mxu0 0.0
        %735 = vmatpush.msra.mxu0 0.0
        %736 = vmatpush.msra.mxu0 0.0
        %737 = vmatpush.msra.mxu0 %v717
        %738 = vmatmul.f32.gmra.mxu0 %v720
        %v739 = vpop.f32.mrf.mxu0
        %v740 = vadd.f32 0.0, %v739
        %741 = vdwg.mxu0
        %742 = vrot.lane.b32.xlu0 %v507, 56
        %v743 = vpop.permute.xlu0 %742
        %v746 = vsel %vm512, %v715, 0
        %748 = vmatpush.msra.mxu0 0.0
        %749 = vmatpush.msra.mxu0 0.0
        %750 = vmatpush.msra.mxu0 0.0
        %751 = vmatpush.msra.mxu0 0.0
        %752 = vmatpush.msra.mxu0 0.0
        %753 = vmatpush.msra.mxu0 0.0
        %754 = vmatpush.msra.mxu0 0.0
        %755 = vmatpush.msra.mxu0 0.0
        %756 = vmatpush.msra.mxu0 0.0
        %757 = vmatpush.msra.mxu0 0.0
        %758 = vmatpush.msra.mxu0 0.0
        %759 = vmatpush.msra.mxu0 0.0
        %760 = vmatpush.msra.mxu0 0.0
        %761 = vmatpush.msra.mxu0 0.0
        %762 = vmatpush.msra.mxu0 0.0
        %763 = vmatpush.msra.mxu0 %v743
        %764 = vmatmul.f32.gmra.mxu0 %v746
        %v765 = vpop.f32.mrf.mxu0
        %v766 = vadd.f32 0.0, %v765
        %767 = vdwg.mxu0
        %768 = vrot.lane.b32.xlu0 %v504, 112
        %v769 = vpop.permute.xlu0 %768
        %770 = vrot.lane.b32.xlu0 %v504, 80
        %v771 = vpop.permute.xlu0 %770
        %v772 = vsel %vm512, %v769, 0
        %v774 = vsel %vm512, %v771, 0
        %776 = vmatpush.xpose.msra.mxu0 0.0
        %777 = vmatpush.xpose.msra.mxu0 0.0
        %778 = vmatpush.xpose.msra.mxu0 0.0
        %779 = vmatpush.xpose.msra.mxu0 0.0
        %780 = vmatpush.xpose.msra.mxu0 0.0
        %781 = vmatpush.xpose.msra.mxu0 0.0
        %782 = vmatpush.xpose.msra.mxu0 0.0
        %783 = vmatpush.xpose.msra.mxu0 0.0
        %784 = vmatpush.xpose.msra.mxu0 0.0
        %785 = vmatpush.xpose.msra.mxu0 0.0
        %786 = vmatpush.xpose.msra.mxu0 0.0
        %787 = vmatpush.xpose.msra.mxu0 0.0
        %788 = vmatpush.xpose.msra.mxu0 0.0
        %789 = vmatpush.xpose.msra.mxu0 0.0
        %790 = vmatpush.xpose.msra.mxu0 0.0
        %791 = vmatpush.xpose.msra.mxu0 %v774
        %792 = vmatmul.f32.gmra.mxu0 %v772
        %v793 = vpop.f32.mrf.mxu0
        %v794 = vadd.f32 %v389, %v793
        %795 = vdwg.mxu0
        %796 = vrot.lane.b32.xlu0 %v507, 112
        %v797 = vpop.permute.xlu0 %796
        %798 = vrot.lane.b32.xlu0 %v507, 80
        %v799 = vpop.permute.xlu0 %798
        %v800 = vsel %vm512, %v797, 0
        %v802 = vsel %vm512, %v799, 0
        %804 = vmatpush.xpose.msra.mxu0 0.0
        %805 = vmatpush.xpose.msra.mxu0 0.0
        %806 = vmatpush.xpose.msra.mxu0 0.0
        %807 = vmatpush.xpose.msra.mxu0 0.0
        %808 = vmatpush.xpose.msra.mxu0 0.0
        %809 = vmatpush.xpose.msra.mxu0 0.0
        %810 = vmatpush.xpose.msra.mxu0 0.0
        %811 = vmatpush.xpose.msra.mxu0 0.0
        %812 = vmatpush.xpose.msra.mxu0 0.0
        %813 = vmatpush.xpose.msra.mxu0 0.0
        %814 = vmatpush.xpose.msra.mxu0 0.0
        %815 = vmatpush.xpose.msra.mxu0 0.0
        %816 = vmatpush.xpose.msra.mxu0 0.0
        %817 = vmatpush.xpose.msra.mxu0 0.0
        %818 = vmatpush.xpose.msra.mxu0 0.0
        %819 = vmatpush.xpose.msra.mxu0 %v802
        %820 = vmatmul.f32.gmra.mxu0 %v800
        %v821 = vpop.f32.mrf.mxu0
        %v822 = vadd.f32 %v390, %v821
        %823 = vdwg.mxu0
        %v824 = vsel %vm512, %v794, -inf
        %825 = vmax.xlane.f32.xlu0 %v824
        %v826 = vpop.xlane.xlu0 %825
        %v827 = vsel %vm512, %v822, -inf
        %828 = vmax.xlane.f32.xlu0 %v827
        %v829 = vpop.xlane.xlu0 %828
        %v830 = vsub.f32 %v794, %v826
        %v831 = vsub.f32 %v822, %v829
        %v832 = vmul.f32 %v830, 1.442695
        %v833 = vpow.pop %v832
        %v834 = vmul.f32 %v831, 1.442695
        %v835 = vpow.pop %v834
        %v836 = vsel %vm512, %v833, 0.0
        %837 = vadd.xlane.f32.xlu0 %v836
        %v838 = vpop.xlane.xlu0 %837
        %v839 = vsel %vm512, %v835, 0.0
        %840 = vadd.xlane.f32.xlu0 %v839
        %v841 = vpop.xlane.xlu0 %840
        %v842 = vrcp.pop %v838
        %v843 = vrcp.pop %v841
        %v844 = vmul.f32 %v833, %v842
        %v845 = vmul.f32 %v835, %v843
        %846 = vrot.lane.b32.xlu0 %v504, 48
        %v847 = vpop.permute.xlu0 %846
        %v850 = vsel %vm512, %v844, 0
        %852 = vmatpush.msra.mxu0 0.0
        %853 = vmatpush.msra.mxu0 0.0
        %854 = vmatpush.msra.mxu0 0.0
        %855 = vmatpush.msra.mxu0 0.0
        %856 = vmatpush.msra.mxu0 0.0
        %857 = vmatpush.msra.mxu0 0.0
        %858 = vmatpush.msra.mxu0 0.0
        %859 = vmatpush.msra.mxu0 0.0
        %860 = vmatpush.msra.mxu0 0.0
        %861 = vmatpush.msra.mxu0 0.0
        %862 = vmatpush.msra.mxu0 0.0
        %863 = vmatpush.msra.mxu0 0.0
        %864 = vmatpush.msra.mxu0 0.0
        %865 = vmatpush.msra.mxu0 0.0
        %866 = vmatpush.msra.mxu0 0.0
        %867 = vmatpush.msra.mxu0 %v847
        %868 = vmatmul.f32.gmra.mxu0 %v850
        %v869 = vpop.f32.mrf.mxu0
        %v870 = vadd.f32 0.0, %v869
        %871 = vdwg.mxu0
        %872 = vrot.lane.b32.xlu0 %v507, 48
        %v873 = vpop.permute.xlu0 %872
        %v876 = vsel %vm512, %v845, 0
        %878 = vmatpush.msra.mxu0 0.0
        %879 = vmatpush.msra.mxu0 0.0
        %880 = vmatpush.msra.mxu0 0.0
        %881 = vmatpush.msra.mxu0 0.0
        %882 = vmatpush.msra.mxu0 0.0
        %883 = vmatpush.msra.mxu0 0.0
        %884 = vmatpush.msra.mxu0 0.0
        %885 = vmatpush.msra.mxu0 0.0
        %886 = vmatpush.msra.mxu0 0.0
        %887 = vmatpush.msra.mxu0 0.0
        %888 = vmatpush.msra.mxu0 0.0
        %889 = vmatpush.msra.mxu0 0.0
        %890 = vmatpush.msra.mxu0 0.0
        %891 = vmatpush.msra.mxu0 0.0
        %892 = vmatpush.msra.mxu0 0.0
        %893 = vmatpush.msra.mxu0 %v873
        %894 = vmatmul.f32.gmra.mxu0 %v876
        %v895 = vpop.f32.mrf.mxu0
        %v896 = vadd.f32 0.0, %v895
        %897 = vdwg.mxu0
        %898 = vrot.lane.b32.xlu0 %v504, 104
        %v899 = vpop.permute.xlu0 %898
        %900 = vrot.lane.b32.xlu0 %v504, 72
        %v901 = vpop.permute.xlu0 %900
        %v902 = vsel %vm512, %v899, 0
        %v904 = vsel %vm512, %v901, 0
        %906 = vmatpush.xpose.msra.mxu0 0.0
        %907 = vmatpush.xpose.msra.mxu0 0.0
        %908 = vmatpush.xpose.msra.mxu0 0.0
        %909 = vmatpush.xpose.msra.mxu0 0.0
        %910 = vmatpush.xpose.msra.mxu0 0.0
        %911 = vmatpush.xpose.msra.mxu0 0.0
        %912 = vmatpush.xpose.msra.mxu0 0.0
        %913 = vmatpush.xpose.msra.mxu0 0.0
        %914 = vmatpush.xpose.msra.mxu0 0.0
        %915 = vmatpush.xpose.msra.mxu0 0.0
        %916 = vmatpush.xpose.msra.mxu0 0.0
        %917 = vmatpush.xpose.msra.mxu0 0.0
        %918 = vmatpush.xpose.msra.mxu0 0.0
        %919 = vmatpush.xpose.msra.mxu0 0.0
        %920 = vmatpush.xpose.msra.mxu0 0.0
        %921 = vmatpush.xpose.msra.mxu0 %v904
        %922 = vmatmul.f32.gmra.mxu0 %v902
        %v923 = vpop.f32.mrf.mxu0
        %v924 = vadd.f32 %v389, %v923
        %925 = vdwg.mxu0
        %926 = vrot.lane.b32.xlu0 %v507, 104
        %v927 = vpop.permute.xlu0 %926
        %928 = vrot.lane.b32.xlu0 %v507, 72
        %v929 = vpop.permute.xlu0 %928
        %v930 = vsel %vm512, %v927, 0
        %v932 = vsel %vm512, %v929, 0
        %934 = vmatpush.xpose.msra.mxu0 0.0
        %935 = vmatpush.xpose.msra.mxu0 0.0
        %936 = vmatpush.xpose.msra.mxu0 0.0
        %937 = vmatpush.xpose.msra.mxu0 0.0
        %938 = vmatpush.xpose.msra.mxu0 0.0
        %939 = vmatpush.xpose.msra.mxu0 0.0
        %940 = vmatpush.xpose.msra.mxu0 0.0
        %941 = vmatpush.xpose.msra.mxu0 0.0
        %942 = vmatpush.xpose.msra.mxu0 0.0
        %943 = vmatpush.xpose.msra.mxu0 0.0
        %944 = vmatpush.xpose.msra.mxu0 0.0
        %945 = vmatpush.xpose.msra.mxu0 0.0
        %946 = vmatpush.xpose.msra.mxu0 0.0
        %947 = vmatpush.xpose.msra.mxu0 0.0
        %948 = vmatpush.xpose.msra.mxu0 0.0
        %949 = vmatpush.xpose.msra.mxu0 %v932
        %950 = vmatmul.f32.gmra.mxu0 %v930
        %v951 = vpop.f32.mrf.mxu0
        %v952 = vadd.f32 %v390, %v951
        %953 = vdwg.mxu0
        %v954 = vsel %vm512, %v924, -inf
        %955 = vmax.xlane.f32.xlu0 %v954
        %v956 = vpop.xlane.xlu0 %955
        %v957 = vsel %vm512, %v952, -inf
        %958 = vmax.xlane.f32.xlu0 %v957
        %v959 = vpop.xlane.xlu0 %958
        %v960 = vsub.f32 %v924, %v956
        %v961 = vsub.f32 %v952, %v959
        %v962 = vmul.f32 %v960, 1.442695
        %v963 = vpow.pop %v962
        %v964 = vmul.f32 %v961, 1.442695
        %v965 = vpow.pop %v964
        %v966 = vsel %vm512, %v963, 0.0
        %967 = vadd.xlane.f32.xlu0 %v966
        %v968 = vpop.xlane.xlu0 %967
        %v969 = vsel %vm512, %v965, 0.0
        %970 = vadd.xlane.f32.xlu0 %v969
        %v971 = vpop.xlane.xlu0 %970
        %v972 = vrcp.pop %v968
        %v973 = vrcp.pop %v971
        %v974 = vmul.f32 %v963, %v972
        %v975 = vmul.f32 %v965, %v973
        %976 = vrot.lane.b32.xlu0 %v504, 40
        %v977 = vpop.permute.xlu0 %976
        %v980 = vsel %vm512, %v974, 0
        %982 = vmatpush.msra.mxu0 0.0
        %983 = vmatpush.msra.mxu0 0.0
        %984 = vmatpush.msra.mxu0 0.0
        %985 = vmatpush.msra.mxu0 0.0
        %986 = vmatpush.msra.mxu0 0.0
        %987 = vmatpush.msra.mxu0 0.0
        %988 = vmatpush.msra.mxu0 0.0
        %989 = vmatpush.msra.mxu0 0.0
        %990 = vmatpush.msra.mxu0 0.0
        %991 = vmatpush.msra.mxu0 0.0
        %992 = vmatpush.msra.mxu0 0.0
        %993 = vmatpush.msra.mxu0 0.0
        %994 = vmatpush.msra.mxu0 0.0
        %995 = vmatpush.msra.mxu0 0.0
        %996 = vmatpush.msra.mxu0 0.0
        %997 = vmatpush.msra.mxu0 %v977
        %998 = vmatmul.f32.gmra.mxu0 %v980
        %v999 = vpop.f32.mrf.mxu0
        %v1000 = vadd.f32 0.0, %v999
        %1001 = vdwg.mxu0
        %1002 = vrot.lane.b32.xlu0 %v507, 40
        %v1003 = vpop.permute.xlu0 %1002
        %v1006 = vsel %vm512, %v975, 0
        %1008 = vmatpush.msra.mxu0 0.0
        %1009 = vmatpush.msra.mxu0 0.0
        %1010 = vmatpush.msra.mxu0 0.0
        %1011 = vmatpush.msra.mxu0 0.0
        %1012 = vmatpush.msra.mxu0 0.0
        %1013 = vmatpush.msra.mxu0 0.0
        %1014 = vmatpush.msra.mxu0 0.0
        %1015 = vmatpush.msra.mxu0 0.0
        %1016 = vmatpush.msra.mxu0 0.0
        %1017 = vmatpush.msra.mxu0 0.0
        %1018 = vmatpush.msra.mxu0 0.0
        %1019 = vmatpush.msra.mxu0 0.0
        %1020 = vmatpush.msra.mxu0 0.0
        %1021 = vmatpush.msra.mxu0 0.0
        %1022 = vmatpush.msra.mxu0 0.0
        %1023 = vmatpush.msra.mxu0 %v1003
        %1024 = vmatmul.f32.gmra.mxu0 %v1006
        %v1025 = vpop.f32.mrf.mxu0
        %v1026 = vadd.f32 0.0, %v1025
        %1027 = vdwg.mxu0
        %1030 = vrot.lane.b32.xlu0 %v740, 8
        %v1031 = vpop.permute.xlu0 %1030
        %1032 = vrot.lane.b32.xlu0 %v766, 8
        %v1033 = vpop.permute.xlu0 %1032
        %1038 = vrot.lane.b32.xlu0 %v870, 16
        %v1039 = vpop.permute.xlu0 %1038
        %1040 = vrot.lane.b32.xlu0 %v896, 16
        %v1041 = vpop.permute.xlu0 %1040
        %1046 = vrot.lane.b32.xlu0 %v1000, 24
        %v1047 = vpop.permute.xlu0 %1046
        %1048 = vrot.lane.b32.xlu0 %v1026, 24
        %v1049 = vpop.permute.xlu0 %1048
        %v1052 = vsel %vm512, %v610, %v1031
        %v1053 = vsel %vm512, %v636, %v1033
        %vm1054 = vcmask 130048
        %v1055 = vsel %vm1054, %v1052, %v1039
        %v1056 = vsel %vm1054, %v1053, %v1041
        %vm1057 = vcmask 195584
        %v1058 = vsel %vm1057, %v1055, %v1047
        %v1059 = vsel %vm1057, %v1056, %v1049
        %1064 = vrot.lane.b32.xlu0 %v393, 32
        %v1065 = vpop.permute.xlu0 %1064
        %1066 = vrot.lane.b32.xlu0 %v394, 32
        %v1067 = vpop.permute.xlu0 %1066
        %1068 = vrot.lane.b32.xlu0 %v395, 32
        %v1069 = vpop.permute.xlu0 %1068
        %1070 = vrot.lane.b32.xlu0 %v396, 32
        %v1071 = vpop.permute.xlu0 %1070
        %v1077 = vsel %vm416, %v1058, 0
        %v1080 = vsel %vm416, %v1059, 0
        %1082 = vmatpush.msra.mxu0 0.0
        %1083 = vmatpush.msra.mxu0 0.0
        %1084 = vmatpush.msra.mxu0 0.0
        %1085 = vmatpush.msra.mxu0 0.0
        %1086 = vmatpush.msra.mxu0 0.0
        %1087 = vmatpush.msra.mxu0 0.0
        %1088 = vmatpush.msra.mxu0 0.0
        %1089 = vmatpush.msra.mxu0 0.0
        %1090 = vmatpush.msra.mxu0 0.0
        %1091 = vmatpush.msra.mxu0 0.0
        %1092 = vmatpush.msra.mxu0 0.0
        %1093 = vmatpush.msra.mxu0 0.0
        %1094 = vmatpush.msra.mxu0 %v1071
        %1095 = vmatpush.msra.mxu0 %v1069
        %1096 = vmatpush.msra.mxu0 %v1067
        %1097 = vmatpush.msra.mxu0 %v1065
        %1098 = vmatmul.f32.gmra.mxu0 %v1077
        %v1099 = vpop.f32.mrf.mxu0
        %v1100 = vadd.f32 0.0, %v1099
        %1101 = vmatmul.f32.gmra.mxu0 %v1080
        %v1102 = vpop.f32.mrf.mxu0
        %v1103 = vadd.f32 0.0, %v1102
        %1104 = vdwg.mxu0
        %v1105 = vadd.f32 %v385, %v1100
        %v1106 = vadd.f32 %v386, %v1103
        %v1107 = vsel %vm416, %v1105, 0.0
        %1108 = vadd.xlane.f32.xlu0 %v1107
        %v1109 = vpop.xlane.xlu0 %1108
        %v1110 = vsel %vm416, %v1106, 0.0
        %1111 = vadd.xlane.f32.xlu0 %v1110
        %v1112 = vpop.xlane.xlu0 %1111
        %v1113 = vmul.f32 %v1109, %v429
        %v1114 = vmul.f32 %v1112, %v429
        %v1115 = vsub.f32 %v1105, %v1113
        %v1116 = vsub.f32 %v1106, %v1114
        %v1117 = vmul.f32 %v1115, %v1115
        %v1118 = vmul.f32 %v1116, %v1116
        %v1119 = vsel %vm416, %v1117, 0.0
        %1120 = vadd.xlane.f32.xlu0 %v1119
        %v1121 = vpop.xlane.xlu0 %1120
        %v1122 = vsel %vm416, %v1118, 0.0
        %1123 = vadd.xlane.f32.xlu0 %v1122
        %v1124 = vpop.xlane.xlu0 %1123
        %v1125 = vmul.f32 %v1121, 0.032258064
        %v1126 = vmul.f32 %v1124, 0.032258064
        %v1127 = vrsqrt.pop %v1125
        %v1128 = vmul.f32 %v1127, %v1125
        %v1129 = vmul.f32 %v1128, %v1127
        %v1130 = vmul.f32 0.5, %v1129
        %v1131 = vsub.f32 1.5, %v1130
        %v1132 = vmul.f32 %v1127, %v1131
        %v1133 = vmul.f32 %v1125, %v1132
        %vm1134 = vcmp.eq.f32.partialorder %v1125, inf
        %v1135 = vsel %vm1134, %v1125, %v1133
        %vm1136 = vcmp.eq.f32.partialorder %v1125, 0.0
        %v1137 = vand.u32 %v1125, 2147483648
        %v1138 = vsel %vm1136, %v1137, %v1135
        %v1139 = vrsqrt.pop %v1126
        %v1140 = vmul.f32 %v1139, %v1126
        %v1141 = vmul.f32 %v1140, %v1139
        %v1142 = vmul.f32 0.5, %v1141
        %v1143 = vsub.f32 1.5, %v1142
        %v1144 = vmul.f32 %v1139, %v1143
        %v1145 = vmul.f32 %v1126, %v1144
        %vm1146 = vcmp.eq.f32.partialorder %v1126, inf
        %v1147 = vsel %vm1146, %v1126, %v1145
        %vm1148 = vcmp.eq.f32.partialorder %v1126, 0.0
        %v1149 = vand.u32 %v1126, 2147483648
        %v1150 = vsel %vm1148, %v1149, %v1147
        %v1151 = vadd.f32 %v1138, 1e-06
        %v1152 = vadd.f32 %v1150, 1e-06
        %v1153 = vrcp.pop %v1151
        %v1154 = vrcp.pop %v1152
        %v1155 = vperm.slane %v401, 2
        %v1156 = vmul.f32 %v1155, %v1115
        %v1157 = vmul.f32 %v1155, %v1116
        %v1158 = vmul.f32 %v1156, %v1153
        %v1159 = vmul.f32 %v1157, %v1154
        %v1160 = vperm.slane %v401, 3
        %v1161 = vadd.f32 %v1158, %v1160
        %v1162 = vadd.f32 %v1159, %v1160
        %v1164 = vsel %vm416, %v1161, 0
        %v1167 = vsel %vm416, %v1162, 0
        %1169 = vmatpush.msra.mxu0 0.0
        %1170 = vmatpush.msra.mxu0 0.0
        %1171 = vmatpush.msra.mxu0 0.0
        %1172 = vmatpush.msra.mxu0 0.0
        %1173 = vmatpush.msra.mxu0 0.0
        %1174 = vmatpush.msra.mxu0 0.0
        %1175 = vmatpush.msra.mxu0 0.0
        %1176 = vmatpush.msra.mxu0 0.0
        %1177 = vmatpush.msra.mxu0 0.0
        %1178 = vmatpush.msra.mxu0 0.0
        %1179 = vmatpush.msra.mxu0 0.0
        %1180 = vmatpush.msra.mxu0 0.0
        %1181 = vmatpush.msra.mxu0 %v400
        %1182 = vmatpush.msra.mxu0 %v399
        %1183 = vmatpush.msra.mxu0 %v398
        %1184 = vmatpush.msra.mxu0 %v397
        %1185 = vmatmul.f32.gmra.mxu0 %v1164
        %v1186 = vpop.f32.mrf.mxu0
        %v1187 = vadd.f32 0.0, %v1186
        %1188 = vmatmul.f32.gmra.mxu0 %v1167
        %v1189 = vpop.f32.mrf.mxu0
        %v1190 = vadd.f32 0.0, %v1189
        %1191 = vdwg.mxu0
        %1196 = vrot.lane.b32.xlu0 %v397, 96
        %v1197 = vpop.permute.xlu0 %1196
        %1198 = vrot.lane.b32.xlu0 %v398, 96
        %v1199 = vpop.permute.xlu0 %1198
        %1200 = vrot.lane.b32.xlu0 %v399, 96
        %v1201 = vpop.permute.xlu0 %1200
        %1202 = vrot.lane.b32.xlu0 %v400, 96
        %v1203 = vpop.permute.xlu0 %1202
        %v1209 = vsel %vm416, %v387, 0
        %v1212 = vsel %vm416, %v388, 0
        %1214 = vmatpush.msra.mxu0 0.0
        %1215 = vmatpush.msra.mxu0 0.0
        %1216 = vmatpush.msra.mxu0 0.0
        %1217 = vmatpush.msra.mxu0 0.0
        %1218 = vmatpush.msra.mxu0 0.0
        %1219 = vmatpush.msra.mxu0 0.0
        %1220 = vmatpush.msra.mxu0 0.0
        %1221 = vmatpush.msra.mxu0 0.0
        %1222 = vmatpush.msra.mxu0 0.0
        %1223 = vmatpush.msra.mxu0 0.0
        %1224 = vmatpush.msra.mxu0 0.0
        %1225 = vmatpush.msra.mxu0 0.0
        %1226 = vmatpush.msra.mxu0 %v1203
        %1227 = vmatpush.msra.mxu0 %v1201
        %1228 = vmatpush.msra.mxu0 %v1199
        %1229 = vmatpush.msra.mxu0 %v1197
        %1230 = vmatmul.f32.gmra.mxu0 %v1209
        %v1231 = vpop.f32.mrf.mxu0
        %v1232 = vadd.f32 0.0, %v1231
        %1233 = vmatmul.f32.gmra.mxu0 %v1212
        %v1234 = vpop.f32.mrf.mxu0
        %v1235 = vadd.f32 0.0, %v1234
        %1236 = vdwg.mxu0
        %v1238 = vsel %vm512, %v1187, 0
        %v1241 = vsel %vm512, %v1232, 0
        %1243 = vmatpush.xpose.msra.mxu0 0.0
        %1244 = vmatpush.xpose.msra.mxu0 0.0
        %1245 = vmatpush.xpose.msra.mxu0 0.0
        %1246 = vmatpush.xpose.msra.mxu0 0.0
        %1247 = vmatpush.xpose.msra.mxu0 0.0
        %1248 = vmatpush.xpose.msra.mxu0 0.0
        %1249 = vmatpush.xpose.msra.mxu0 0.0
        %1250 = vmatpush.xpose.msra.mxu0 0.0
        %1251 = vmatpush.xpose.msra.mxu0 0.0
        %1252 = vmatpush.xpose.msra.mxu0 0.0
        %1253 = vmatpush.xpose.msra.mxu0 0.0
        %1254 = vmatpush.xpose.msra.mxu0 0.0
        %1255 = vmatpush.xpose.msra.mxu0 0.0
        %1256 = vmatpush.xpose.msra.mxu0 0.0
        %1257 = vmatpush.xpose.msra.mxu0 0.0
        %1258 = vmatpush.xpose.msra.mxu0 %v1241
        %1259 = vmatmul.f32.gmra.mxu0 %v1238
        %v1260 = vpop.f32.mrf.mxu0
        %v1261 = vadd.f32 %v391, %v1260
        %1262 = vdwg.mxu0
        %v1264 = vsel %vm512, %v1190, 0
        %v1267 = vsel %vm512, %v1235, 0
        %1269 = vmatpush.xpose.msra.mxu0 0.0
        %1270 = vmatpush.xpose.msra.mxu0 0.0
        %1271 = vmatpush.xpose.msra.mxu0 0.0
        %1272 = vmatpush.xpose.msra.mxu0 0.0
        %1273 = vmatpush.xpose.msra.mxu0 0.0
        %1274 = vmatpush.xpose.msra.mxu0 0.0
        %1275 = vmatpush.xpose.msra.mxu0 0.0
        %1276 = vmatpush.xpose.msra.mxu0 0.0
        %1277 = vmatpush.xpose.msra.mxu0 0.0
        %1278 = vmatpush.xpose.msra.mxu0 0.0
        %1279 = vmatpush.xpose.msra.mxu0 0.0
        %1280 = vmatpush.xpose.msra.mxu0 0.0
        %1281 = vmatpush.xpose.msra.mxu0 0.0
        %1282 = vmatpush.xpose.msra.mxu0 0.0
        %1283 = vmatpush.xpose.msra.mxu0 0.0
        %1284 = vmatpush.xpose.msra.mxu0 %v1267
        %1285 = vmatmul.f32.gmra.mxu0 %v1264
        %v1286 = vpop.f32.mrf.mxu0
        %v1287 = vadd.f32 %v392, %v1286
        %1288 = vdwg.mxu0
        %v1289 = vsel %vm512, %v1261, -inf
        %1290 = vmax.xlane.f32.xlu0 %v1289
        %v1291 = vpop.xlane.xlu0 %1290
        %v1292 = vsel %vm512, %v1287, -inf
        %1293 = vmax.xlane.f32.xlu0 %v1292
        %v1294 = vpop.xlane.xlu0 %1293
        %v1295 = vsub.f32 %v1261, %v1291
        %v1296 = vsub.f32 %v1287, %v1294
        %v1297 = vmul.f32 %v1295, 1.442695
        %v1298 = vpow.pop %v1297
        %v1299 = vmul.f32 %v1296, 1.442695
        %v1300 = vpow.pop %v1299
        %v1301 = vsel %vm512, %v1298, 0.0
        %1302 = vadd.xlane.f32.xlu0 %v1301
        %v1303 = vpop.xlane.xlu0 %1302
        %v1304 = vsel %vm512, %v1300, 0.0
        %1305 = vadd.xlane.f32.xlu0 %v1304
        %v1306 = vpop.xlane.xlu0 %1305
        %v1307 = vrcp.pop %v1303
        %v1308 = vrcp.pop %v1306
        %v1309 = vmul.f32 %v1298, %v1307
        %v1310 = vmul.f32 %v1300, %v1308
        %1311 = vrot.lane.b32.xlu0 %v1232, 96
        %v1312 = vpop.permute.xlu0 %1311
        %v1315 = vsel %vm512, %v1309, 0
        %1317 = vmatpush.msra.mxu0 0.0
        %1318 = vmatpush.msra.mxu0 0.0
        %1319 = vmatpush.msra.mxu0 0.0
        %1320 = vmatpush.msra.mxu0 0.0
        %1321 = vmatpush.msra.mxu0 0.0
        %1322 = vmatpush.msra.mxu0 0.0
        %1323 = vmatpush.msra.mxu0 0.0
        %1324 = vmatpush.msra.mxu0 0.0
        %1325 = vmatpush.msra.mxu0 0.0
        %1326 = vmatpush.msra.mxu0 0.0
        %1327 = vmatpush.msra.mxu0 0.0
        %1328 = vmatpush.msra.mxu0 0.0
        %1329 = vmatpush.msra.mxu0 0.0
        %1330 = vmatpush.msra.mxu0 0.0
        %1331 = vmatpush.msra.mxu0 0.0
        %1332 = vmatpush.msra.mxu0 %v1312
        %1333 = vmatmul.f32.gmra.mxu0 %v1315
        %v1334 = vpop.f32.mrf.mxu0
        %v1335 = vadd.f32 0.0, %v1334
        %1336 = vdwg.mxu0
        %1337 = vrot.lane.b32.xlu0 %v1235, 96
        %v1338 = vpop.permute.xlu0 %1337
        %v1341 = vsel %vm512, %v1310, 0
        %1343 = vmatpush.msra.mxu0 0.0
        %1344 = vmatpush.msra.mxu0 0.0
        %1345 = vmatpush.msra.mxu0 0.0
        %1346 = vmatpush.msra.mxu0 0.0
        %1347 = vmatpush.msra.mxu0 0.0
        %1348 = vmatpush.msra.mxu0 0.0
        %1349 = vmatpush.msra.mxu0 0.0
        %1350 = vmatpush.msra.mxu0 0.0
        %1351 = vmatpush.msra.mxu0 0.0
        %1352 = vmatpush.msra.mxu0 0.0
        %1353 = vmatpush.msra.mxu0 0.0
        %1354 = vmatpush.msra.mxu0 0.0
        %1355 = vmatpush.msra.mxu0 0.0
        %1356 = vmatpush.msra.mxu0 0.0
        %1357 = vmatpush.msra.mxu0 0.0
        %1358 = vmatpush.msra.mxu0 %v1338
        %1359 = vmatmul.f32.gmra.mxu0 %v1341
        %v1360 = vpop.f32.mrf.mxu0
        %v1361 = vadd.f32 0.0, %v1360
        %1362 = vdwg.mxu0
        %1363 = vrot.lane.b32.xlu0 %v1187, 120
        %v1364 = vpop.permute.xlu0 %1363
        %1365 = vrot.lane.b32.xlu0 %v1232, 120
        %v1366 = vpop.permute.xlu0 %1365
        %v1367 = vsel %vm512, %v1364, 0
        %v1369 = vsel %vm512, %v1366, 0
        %1371 = vmatpush.xpose.msra.mxu0 0.0
        %1372 = vmatpush.xpose.msra.mxu0 0.0
        %1373 = vmatpush.xpose.msra.mxu0 0.0
        %1374 = vmatpush.xpose.msra.mxu0 0.0
        %1375 = vmatpush.xpose.msra.mxu0 0.0
        %1376 = vmatpush.xpose.msra.mxu0 0.0
        %1377 = vmatpush.xpose.msra.mxu0 0.0
        %1378 = vmatpush.xpose.msra.mxu0 0.0
        %1379 = vmatpush.xpose.msra.mxu0 0.0
        %1380 = vmatpush.xpose.msra.mxu0 0.0
        %1381 = vmatpush.xpose.msra.mxu0 0.0
        %1382 = vmatpush.xpose.msra.mxu0 0.0
        %1383 = vmatpush.xpose.msra.mxu0 0.0
        %1384 = vmatpush.xpose.msra.mxu0 0.0
        %1385 = vmatpush.xpose.msra.mxu0 0.0
        %1386 = vmatpush.xpose.msra.mxu0 %v1369
        %1387 = vmatmul.f32.gmra.mxu0 %v1367
        %v1388 = vpop.f32.mrf.mxu0
        %v1389 = vadd.f32 %v391, %v1388
        %1390 = vdwg.mxu0
        %1391 = vrot.lane.b32.xlu0 %v1190, 120
        %v1392 = vpop.permute.xlu0 %1391
        %1393 = vrot.lane.b32.xlu0 %v1235, 120
        %v1394 = vpop.permute.xlu0 %1393
        %v1395 = vsel %vm512, %v1392, 0
        %v1397 = vsel %vm512, %v1394, 0
        %1399 = vmatpush.xpose.msra.mxu0 0.0
        %1400 = vmatpush.xpose.msra.mxu0 0.0
        %1401 = vmatpush.xpose.msra.mxu0 0.0
        %1402 = vmatpush.xpose.msra.mxu0 0.0
        %1403 = vmatpush.xpose.msra.mxu0 0.0
        %1404 = vmatpush.xpose.msra.mxu0 0.0
        %1405 = vmatpush.xpose.msra.mxu0 0.0
        %1406 = vmatpush.xpose.msra.mxu0 0.0
        %1407 = vmatpush.xpose.msra.mxu0 0.0
        %1408 = vmatpush.xpose.msra.mxu0 0.0
        %1409 = vmatpush.xpose.msra.mxu0 0.0
        %1410 = vmatpush.xpose.msra.mxu0 0.0
        %1411 = vmatpush.xpose.msra.mxu0 0.0
        %1412 = vmatpush.xpose.msra.mxu0 0.0
        %1413 = vmatpush.xpose.msra.mxu0 0.0
        %1414 = vmatpush.xpose.msra.mxu0 %v1397
        %1415 = vmatmul.f32.gmra.mxu0 %v1395
        %v1416 = vpop.f32.mrf.mxu0
        %v1417 = vadd.f32 %v392, %v1416
        %1418 = vdwg.mxu0
        %v1419 = vsel %vm512, %v1389, -inf
        %1420 = vmax.xlane.f32.xlu0 %v1419
        %v1421 = vpop.xlane.xlu0 %1420
        %v1422 = vsel %vm512, %v1417, -inf
        %1423 = vmax.xlane.f32.xlu0 %v1422
        %v1424 = vpop.xlane.xlu0 %1423
        %v1425 = vsub.f32 %v1389, %v1421
        %v1426 = vsub.f32 %v1417, %v1424
        %v1427 = vmul.f32 %v1425, 1.442695
        %v1428 = vpow.pop %v1427
        %v1429 = vmul.f32 %v1426, 1.442695
        %v1430 = vpow.pop %v1429
        %v1431 = vsel %vm512, %v1428, 0.0
        %1432 = vadd.xlane.f32.xlu0 %v1431
        %v1433 = vpop.xlane.xlu0 %1432
        %v1434 = vsel %vm512, %v1430, 0.0
        %1435 = vadd.xlane.f32.xlu0 %v1434
        %v1436 = vpop.xlane.xlu0 %1435
        %v1437 = vrcp.pop %v1433
        %v1438 = vrcp.pop %v1436
        %v1439 = vmul.f32 %v1428, %v1437
        %v1440 = vmul.f32 %v1430, %v1438
        %1441 = vrot.lane.b32.xlu0 %v1232, 88
        %v1442 = vpop.permute.xlu0 %1441
        %v1445 = vsel %vm512, %v1439, 0
        %1447 = vmatpush.msra.mxu0 0.0
        %1448 = vmatpush.msra.mxu0 0.0
        %1449 = vmatpush.msra.mxu0 0.0
        %1450 = vmatpush.msra.mxu0 0.0
        %1451 = vmatpush.msra.mxu0 0.0
        %1452 = vmatpush.msra.mxu0 0.0
        %1453 = vmatpush.msra.mxu0 0.0
        %1454 = vmatpush.msra.mxu0 0.0
        %1455 = vmatpush.msra.mxu0 0.0
        %1456 = vmatpush.msra.mxu0 0.0
        %1457 = vmatpush.msra.mxu0 0.0
        %1458 = vmatpush.msra.mxu0 0.0
        %1459 = vmatpush.msra.mxu0 0.0
        %1460 = vmatpush.msra.mxu0 0.0
        %1461 = vmatpush.msra.mxu0 0.0
        %1462 = vmatpush.msra.mxu0 %v1442
        %1463 = vmatmul.f32.gmra.mxu0 %v1445
        %v1464 = vpop.f32.mrf.mxu0
        %v1465 = vadd.f32 0.0, %v1464
        %1466 = vdwg.mxu0
        %1467 = vrot.lane.b32.xlu0 %v1235, 88
        %v1468 = vpop.permute.xlu0 %1467
        %v1471 = vsel %vm512, %v1440, 0
        %1473 = vmatpush.msra.mxu0 0.0
        %1474 = vmatpush.msra.mxu0 0.0
        %1475 = vmatpush.msra.mxu0 0.0
        %1476 = vmatpush.msra.mxu0 0.0
        %1477 = vmatpush.msra.mxu0 0.0
        %1478 = vmatpush.msra.mxu0 0.0
        %1479 = vmatpush.msra.mxu0 0.0
        %1480 = vmatpush.msra.mxu0 0.0
        %1481 = vmatpush.msra.mxu0 0.0
        %1482 = vmatpush.msra.mxu0 0.0
        %1483 = vmatpush.msra.mxu0 0.0
        %1484 = vmatpush.msra.mxu0 0.0
        %1485 = vmatpush.msra.mxu0 0.0
        %1486 = vmatpush.msra.mxu0 0.0
        %1487 = vmatpush.msra.mxu0 0.0
        %1488 = vmatpush.msra.mxu0 %v1468
        %1489 = vmatmul.f32.gmra.mxu0 %v1471
        %v1490 = vpop.f32.mrf.mxu0
        %v1491 = vadd.f32 0.0, %v1490
        %1492 = vdwg.mxu0
        %1493 = vrot.lane.b32.xlu0 %v1187, 112
        %v1494 = vpop.permute.xlu0 %1493
        %1495 = vrot.lane.b32.xlu0 %v1232, 112
        %v1496 = vpop.permute.xlu0 %1495
        %v1497 = vsel %vm512, %v1494, 0
        %v1499 = vsel %vm512, %v1496, 0
        %1501 = vmatpush.xpose.msra.mxu0 0.0
        %1502 = vmatpush.xpose.msra.mxu0 0.0
        %1503 = vmatpush.xpose.msra.mxu0 0.0
        %1504 = vmatpush.xpose.msra.mxu0 0.0
        %1505 = vmatpush.xpose.msra.mxu0 0.0
        %1506 = vmatpush.xpose.msra.mxu0 0.0
        %1507 = vmatpush.xpose.msra.mxu0 0.0
        %1508 = vmatpush.xpose.msra.mxu0 0.0
        %1509 = vmatpush.xpose.msra.mxu0 0.0
        %1510 = vmatpush.xpose.msra.mxu0 0.0
        %1511 = vmatpush.xpose.msra.mxu0 0.0
        %1512 = vmatpush.xpose.msra.mxu0 0.0
        %1513 = vmatpush.xpose.msra.mxu0 0.0
        %1514 = vmatpush.xpose.msra.mxu0 0.0
        %1515 = vmatpush.xpose.msra.mxu0 0.0
        %1516 = vmatpush.xpose.msra.mxu0 %v1499
        %1517 = vmatmul.f32.gmra.mxu0 %v1497
        %v1518 = vpop.f32.mrf.mxu0
        %v1519 = vadd.f32 %v391, %v1518
        %1520 = vdwg.mxu0
        %1521 = vrot.lane.b32.xlu0 %v1190, 112
        %v1522 = vpop.permute.xlu0 %1521
        %1523 = vrot.lane.b32.xlu0 %v1235, 112
        %v1524 = vpop.permute.xlu0 %1523
        %v1525 = vsel %vm512, %v1522, 0
        %v1527 = vsel %vm512, %v1524, 0
        %1529 = vmatpush.xpose.msra.mxu0 0.0
        %1530 = vmatpush.xpose.msra.mxu0 0.0
        %1531 = vmatpush.xpose.msra.mxu0 0.0
        %1532 = vmatpush.xpose.msra.mxu0 0.0
        %1533 = vmatpush.xpose.msra.mxu0 0.0
        %1534 = vmatpush.xpose.msra.mxu0 0.0
        %1535 = vmatpush.xpose.msra.mxu0 0.0
        %1536 = vmatpush.xpose.msra.mxu0 0.0
        %1537 = vmatpush.xpose.msra.mxu0 0.0
        %1538 = vmatpush.xpose.msra.mxu0 0.0
        %1539 = vmatpush.xpose.msra.mxu0 0.0
        %1540 = vmatpush.xpose.msra.mxu0 0.0
        %1541 = vmatpush.xpose.msra.mxu0 0.0
        %1542 = vmatpush.xpose.msra.mxu0 0.0
        %1543 = vmatpush.xpose.msra.mxu0 0.0
        %1544 = vmatpush.xpose.msra.mxu0 %v1527
        %1545 = vmatmul.f32.gmra.mxu0 %v1525
        %v1546 = vpop.f32.mrf.mxu0
        %v1547 = vadd.f32 %v392, %v1546
        %1548 = vdwg.mxu0
        %v1549 = vsel %vm512, %v1519, -inf
        %1550 = vmax.xlane.f32.xlu0 %v1549
        %v1551 = vpop.xlane.xlu0 %1550
        %v1552 = vsel %vm512, %v1547, -inf
        %1553 = vmax.xlane.f32.xlu0 %v1552
        %v1554 = vpop.xlane.xlu0 %1553
        %v1555 = vsub.f32 %v1519, %v1551
        %v1556 = vsub.f32 %v1547, %v1554
        %v1557 = vmul.f32 %v1555, 1.442695
        %v1558 = vpow.pop %v1557
        %v1559 = vmul.f32 %v1556, 1.442695
        %v1560 = vpow.pop %v1559
        %v1561 = vsel %vm512, %v1558, 0.0
        %1562 = vadd.xlane.f32.xlu0 %v1561
        %v1563 = vpop.xlane.xlu0 %1562
        %v1564 = vsel %vm512, %v1560, 0.0
        %1565 = vadd.xlane.f32.xlu0 %v1564
        %v1566 = vpop.xlane.xlu0 %1565
        %v1567 = vrcp.pop %v1563
        %v1568 = vrcp.pop %v1566
        %v1569 = vmul.f32 %v1558, %v1567
        %v1570 = vmul.f32 %v1560, %v1568
        %1571 = vrot.lane.b32.xlu0 %v1232, 80
        %v1572 = vpop.permute.xlu0 %1571
        %v1575 = vsel %vm512, %v1569, 0
        %1577 = vmatpush.msra.mxu0 0.0
        %1578 = vmatpush.msra.mxu0 0.0
        %1579 = vmatpush.msra.mxu0 0.0
        %1580 = vmatpush.msra.mxu0 0.0
        %1581 = vmatpush.msra.mxu0 0.0
        %1582 = vmatpush.msra.mxu0 0.0
        %1583 = vmatpush.msra.mxu0 0.0
        %1584 = vmatpush.msra.mxu0 0.0
        %1585 = vmatpush.msra.mxu0 0.0
        %1586 = vmatpush.msra.mxu0 0.0
        %1587 = vmatpush.msra.mxu0 0.0
        %1588 = vmatpush.msra.mxu0 0.0
        %1589 = vmatpush.msra.mxu0 0.0
        %1590 = vmatpush.msra.mxu0 0.0
        %1591 = vmatpush.msra.mxu0 0.0
        %1592 = vmatpush.msra.mxu0 %v1572
        %1593 = vmatmul.f32.gmra.mxu0 %v1575
        %v1594 = vpop.f32.mrf.mxu0
        %v1595 = vadd.f32 0.0, %v1594
        %1596 = vdwg.mxu0
        %1597 = vrot.lane.b32.xlu0 %v1235, 80
        %v1598 = vpop.permute.xlu0 %1597
        %v1601 = vsel %vm512, %v1570, 0
        %1603 = vmatpush.msra.mxu0 0.0
        %1604 = vmatpush.msra.mxu0 0.0
        %1605 = vmatpush.msra.mxu0 0.0
        %1606 = vmatpush.msra.mxu0 0.0
        %1607 = vmatpush.msra.mxu0 0.0
        %1608 = vmatpush.msra.mxu0 0.0
        %1609 = vmatpush.msra.mxu0 0.0
        %1610 = vmatpush.msra.mxu0 0.0
        %1611 = vmatpush.msra.mxu0 0.0
        %1612 = vmatpush.msra.mxu0 0.0
        %1613 = vmatpush.msra.mxu0 0.0
        %1614 = vmatpush.msra.mxu0 0.0
        %1615 = vmatpush.msra.mxu0 0.0
        %1616 = vmatpush.msra.mxu0 0.0
        %1617 = vmatpush.msra.mxu0 0.0
        %1618 = vmatpush.msra.mxu0 %v1598
        %1619 = vmatmul.f32.gmra.mxu0 %v1601
        %v1620 = vpop.f32.mrf.mxu0
        %v1621 = vadd.f32 0.0, %v1620
        %1622 = vdwg.mxu0
        %1623 = vrot.lane.b32.xlu0 %v1187, 104
        %v1624 = vpop.permute.xlu0 %1623
        %1625 = vrot.lane.b32.xlu0 %v1232, 104
        %v1626 = vpop.permute.xlu0 %1625
        %v1627 = vsel %vm512, %v1624, 0
        %v1629 = vsel %vm512, %v1626, 0
        %1631 = vmatpush.xpose.msra.mxu0 0.0
        %1632 = vmatpush.xpose.msra.mxu0 0.0
        %1633 = vmatpush.xpose.msra.mxu0 0.0
        %1634 = vmatpush.xpose.msra.mxu0 0.0
        %1635 = vmatpush.xpose.msra.mxu0 0.0
        %1636 = vmatpush.xpose.msra.mxu0 0.0
        %1637 = vmatpush.xpose.msra.mxu0 0.0
        %1638 = vmatpush.xpose.msra.mxu0 0.0
        %1639 = vmatpush.xpose.msra.mxu0 0.0
        %1640 = vmatpush.xpose.msra.mxu0 0.0
        %1641 = vmatpush.xpose.msra.mxu0 0.0
        %1642 = vmatpush.xpose.msra.mxu0 0.0
        %1643 = vmatpush.xpose.msra.mxu0 0.0
        %1644 = vmatpush.xpose.msra.mxu0 0.0
        %1645 = vmatpush.xpose.msra.mxu0 0.0
        %1646 = vmatpush.xpose.msra.mxu0 %v1629
        %1647 = vmatmul.f32.gmra.mxu0 %v1627
        %v1648 = vpop.f32.mrf.mxu0
        %v1649 = vadd.f32 %v391, %v1648
        %1650 = vdwg.mxu0
        %1651 = vrot.lane.b32.xlu0 %v1190, 104
        %v1652 = vpop.permute.xlu0 %1651
        %1653 = vrot.lane.b32.xlu0 %v1235, 104
        %v1654 = vpop.permute.xlu0 %1653
        %v1655 = vsel %vm512, %v1652, 0
        %v1657 = vsel %vm512, %v1654, 0
        %1659 = vmatpush.xpose.msra.mxu0 0.0
        %1660 = vmatpush.xpose.msra.mxu0 0.0
        %1661 = vmatpush.xpose.msra.mxu0 0.0
        %1662 = vmatpush.xpose.msra.mxu0 0.0
        %1663 = vmatpush.xpose.msra.mxu0 0.0
        %1664 = vmatpush.xpose.msra.mxu0 0.0
        %1665 = vmatpush.xpose.msra.mxu0 0.0
        %1666 = vmatpush.xpose.msra.mxu0 0.0
        %1667 = vmatpush.xpose.msra.mxu0 0.0
        %1668 = vmatpush.xpose.msra.mxu0 0.0
        %1669 = vmatpush.xpose.msra.mxu0 0.0
        %1670 = vmatpush.xpose.msra.mxu0 0.0
        %1671 = vmatpush.xpose.msra.mxu0 0.0
        %1672 = vmatpush.xpose.msra.mxu0 0.0
        %1673 = vmatpush.xpose.msra.mxu0 0.0
        %1674 = vmatpush.xpose.msra.mxu0 %v1657
        %1675 = vmatmul.f32.gmra.mxu0 %v1655
        %v1676 = vpop.f32.mrf.mxu0
        %v1677 = vadd.f32 %v392, %v1676
        %1678 = vdwg.mxu0
        %v1679 = vsel %vm512, %v1649, -inf
        %1680 = vmax.xlane.f32.xlu0 %v1679
        %v1681 = vpop.xlane.xlu0 %1680
        %v1682 = vsel %vm512, %v1677, -inf
        %1683 = vmax.xlane.f32.xlu0 %v1682
        %v1684 = vpop.xlane.xlu0 %1683
        %v1685 = vsub.f32 %v1649, %v1681
        %v1686 = vsub.f32 %v1677, %v1684
        %v1687 = vmul.f32 %v1685, 1.442695
        %v1688 = vpow.pop %v1687
        %v1689 = vmul.f32 %v1686, 1.442695
        %v1690 = vpow.pop %v1689
        %v1691 = vsel %vm512, %v1688, 0.0
        %1692 = vadd.xlane.f32.xlu0 %v1691
        %v1693 = vpop.xlane.xlu0 %1692
        %v1694 = vsel %vm512, %v1690, 0.0
        %1695 = vadd.xlane.f32.xlu0 %v1694
        %v1696 = vpop.xlane.xlu0 %1695
        %v1697 = vrcp.pop %v1693
        %v1698 = vrcp.pop %v1696
        %v1699 = vmul.f32 %v1688, %v1697
        %v1700 = vmul.f32 %v1690, %v1698
        %1701 = vrot.lane.b32.xlu0 %v1232, 72
        %v1702 = vpop.permute.xlu0 %1701
        %v1705 = vsel %vm512, %v1699, 0
        %1707 = vmatpush.msra.mxu0 0.0
        %1708 = vmatpush.msra.mxu0 0.0
        %1709 = vmatpush.msra.mxu0 0.0
        %1710 = vmatpush.msra.mxu0 0.0
        %1711 = vmatpush.msra.mxu0 0.0
        %1712 = vmatpush.msra.mxu0 0.0
        %1713 = vmatpush.msra.mxu0 0.0
        %1714 = vmatpush.msra.mxu0 0.0
        %1715 = vmatpush.msra.mxu0 0.0
        %1716 = vmatpush.msra.mxu0 0.0
        %1717 = vmatpush.msra.mxu0 0.0
        %1718 = vmatpush.msra.mxu0 0.0
        %1719 = vmatpush.msra.mxu0 0.0
        %1720 = vmatpush.msra.mxu0 0.0
        %1721 = vmatpush.msra.mxu0 0.0
        %1722 = vmatpush.msra.mxu0 %v1702
        %1723 = vmatmul.f32.gmra.mxu0 %v1705
        %v1724 = vpop.f32.mrf.mxu0
        %v1725 = vadd.f32 0.0, %v1724
        %1726 = vdwg.mxu0
        %1727 = vrot.lane.b32.xlu0 %v1235, 72
        %v1728 = vpop.permute.xlu0 %1727
        %v1731 = vsel %vm512, %v1700, 0
        %1733 = vmatpush.msra.mxu0 0.0
        %1734 = vmatpush.msra.mxu0 0.0
        %1735 = vmatpush.msra.mxu0 0.0
        %1736 = vmatpush.msra.mxu0 0.0
        %1737 = vmatpush.msra.mxu0 0.0
        %1738 = vmatpush.msra.mxu0 0.0
        %1739 = vmatpush.msra.mxu0 0.0
        %1740 = vmatpush.msra.mxu0 0.0
        %1741 = vmatpush.msra.mxu0 0.0
        %1742 = vmatpush.msra.mxu0 0.0
        %1743 = vmatpush.msra.mxu0 0.0
        %1744 = vmatpush.msra.mxu0 0.0
        %1745 = vmatpush.msra.mxu0 0.0
        %1746 = vmatpush.msra.mxu0 0.0
        %1747 = vmatpush.msra.mxu0 0.0
        %1748 = vmatpush.msra.mxu0 %v1728
        %1749 = vmatmul.f32.gmra.mxu0 %v1731
        %v1750 = vpop.f32.mrf.mxu0
        %v1751 = vadd.f32 0.0, %v1750
        %1752 = vdwg.mxu0
        %1755 = vrot.lane.b32.xlu0 %v1465, 8
        %v1756 = vpop.permute.xlu0 %1755
        %1757 = vrot.lane.b32.xlu0 %v1491, 8
        %v1758 = vpop.permute.xlu0 %1757
        %1763 = vrot.lane.b32.xlu0 %v1595, 16
        %v1764 = vpop.permute.xlu0 %1763
        %1765 = vrot.lane.b32.xlu0 %v1621, 16
        %v1766 = vpop.permute.xlu0 %1765
        %1771 = vrot.lane.b32.xlu0 %v1725, 24
        %v1772 = vpop.permute.xlu0 %1771
        %1773 = vrot.lane.b32.xlu0 %v1751, 24
        %v1774 = vpop.permute.xlu0 %1773
        %v1777 = vsel %vm512, %v1335, %v1756
        %v1778 = vsel %vm512, %v1361, %v1758
        %v1779 = vsel %vm1054, %v1777, %v1764
        %v1780 = vsel %vm1054, %v1778, %v1766
        %v1781 = vsel %vm1057, %v1779, %v1772
        %v1782 = vsel %vm1057, %v1780, %v1774
        %1783 = vrot.lane.b32.xlu0 %v397, 32
        %v1784 = vpop.permute.xlu0 %1783
        %1785 = vrot.lane.b32.xlu0 %v398, 32
        %v1786 = vpop.permute.xlu0 %1785
        %1787 = vrot.lane.b32.xlu0 %v399, 32
        %v1788 = vpop.permute.xlu0 %1787
        %1789 = vrot.lane.b32.xlu0 %v400, 32
        %v1790 = vpop.permute.xlu0 %1789
        %v1796 = vsel %vm416, %v1781, 0
        %v1799 = vsel %vm416, %v1782, 0
        %1801 = vmatpush.msra.mxu0 0.0
        %1802 = vmatpush.msra.mxu0 0.0
        %1803 = vmatpush.msra.mxu0 0.0
        %1804 = vmatpush.msra.mxu0 0.0
        %1805 = vmatpush.msra.mxu0 0.0
        %1806 = vmatpush.msra.mxu0 0.0
        %1807 = vmatpush.msra.mxu0 0.0
        %1808 = vmatpush.msra.mxu0 0.0
        %1809 = vmatpush.msra.mxu0 0.0
        %1810 = vmatpush.msra.mxu0 0.0
        %1811 = vmatpush.msra.mxu0 0.0
        %1812 = vmatpush.msra.mxu0 0.0
        %1813 = vmatpush.msra.mxu0 %v1790
        %1814 = vmatpush.msra.mxu0 %v1788
        %1815 = vmatpush.msra.mxu0 %v1786
        %1816 = vmatpush.msra.mxu0 %v1784
        %1817 = vmatmul.f32.gmra.mxu0 %v1796
        %v1818 = vpop.f32.mrf.mxu0
        %v1819 = vadd.f32 0.0, %v1818
        %1820 = vmatmul.f32.gmra.mxu0 %v1799
        %v1821 = vpop.f32.mrf.mxu0
        %v1822 = vadd.f32 0.0, %v1821
        %1823 = vdwg.mxu0
        %v1824 = vadd.f32 %v1105, %v1819
        %v1825 = vadd.f32 %v1106, %v1822
        %v1826 = vsel %vm416, %v1824, 0.0
        %1827 = vadd.xlane.f32.xlu0 %v1826
        %v1828 = vpop.xlane.xlu0 %1827
        %v1829 = vsel %vm416, %v1825, 0.0
        %1830 = vadd.xlane.f32.xlu0 %v1829
        %v1831 = vpop.xlane.xlu0 %1830
        %v1832 = vmul.f32 %v1828, %v429
        %v1833 = vmul.f32 %v1831, %v429
        %v1834 = vsub.f32 %v1824, %v1832
        %v1835 = vsub.f32 %v1825, %v1833
        %v1836 = vmul.f32 %v1834, %v1834
        %v1837 = vmul.f32 %v1835, %v1835
        %v1838 = vsel %vm416, %v1836, 0.0
        %1839 = vadd.xlane.f32.xlu0 %v1838
        %v1840 = vpop.xlane.xlu0 %1839
        %v1841 = vsel %vm416, %v1837, 0.0
        %1842 = vadd.xlane.f32.xlu0 %v1841
        %v1843 = vpop.xlane.xlu0 %1842
        %v1844 = vmul.f32 %v1840, 0.032258064
        %v1845 = vmul.f32 %v1843, 0.032258064
        %v1846 = vrsqrt.pop %v1844
        %v1847 = vmul.f32 %v1846, %v1844
        %v1848 = vmul.f32 %v1847, %v1846
        %v1849 = vmul.f32 0.5, %v1848
        %v1850 = vsub.f32 1.5, %v1849
        %v1851 = vmul.f32 %v1846, %v1850
        %v1852 = vmul.f32 %v1844, %v1851
        %vm1853 = vcmp.eq.f32.partialorder %v1844, inf
        %v1854 = vsel %vm1853, %v1844, %v1852
        %vm1855 = vcmp.eq.f32.partialorder %v1844, 0.0
        %v1856 = vand.u32 %v1844, 2147483648
        %v1857 = vsel %vm1855, %v1856, %v1854
        %v1858 = vrsqrt.pop %v1845
        %v1859 = vmul.f32 %v1858, %v1845
        %v1860 = vmul.f32 %v1859, %v1858
        %v1861 = vmul.f32 0.5, %v1860
        %v1862 = vsub.f32 1.5, %v1861
        %v1863 = vmul.f32 %v1858, %v1862
        %v1864 = vmul.f32 %v1845, %v1863
        %vm1865 = vcmp.eq.f32.partialorder %v1845, inf
        %v1866 = vsel %vm1865, %v1845, %v1864
        %vm1867 = vcmp.eq.f32.partialorder %v1845, 0.0
        %v1868 = vand.u32 %v1845, 2147483648
        %v1869 = vsel %vm1867, %v1868, %v1866
        %v1870 = vadd.f32 %v1857, 1e-06
        %v1871 = vadd.f32 %v1869, 1e-06
        %v1872 = vrcp.pop %v1870
        %v1873 = vrcp.pop %v1871
        %v1874 = vperm.slane %v401, 4
        %v1875 = vmul.f32 %v1874, %v1834
        %v1876 = vmul.f32 %v1874, %v1835
        %v1877 = vmul.f32 %v1875, %v1872
        %v1878 = vmul.f32 %v1876, %v1873
        %v1879 = vperm.slane %v401, 5
        %v1880 = vadd.f32 %v1877, %v1879
        %v1881 = vadd.f32 %v1878, %v1879
        %v1882 = vperm.slane %v406, 0
        %v1884 = vsel %vm416, %v1880, 0
        %v1887 = vsel %vm416, %v1881, 0
        %1889 = vmatpush.msra.mxu0 0.0
        %1890 = vmatpush.msra.mxu0 0.0
        %1891 = vmatpush.msra.mxu0 0.0
        %1892 = vmatpush.msra.mxu0 0.0
        %1893 = vmatpush.msra.mxu0 0.0
        %1894 = vmatpush.msra.mxu0 0.0
        %1895 = vmatpush.msra.mxu0 0.0
        %1896 = vmatpush.msra.mxu0 0.0
        %1897 = vmatpush.msra.mxu0 0.0
        %1898 = vmatpush.msra.mxu0 0.0
        %1899 = vmatpush.msra.mxu0 0.0
        %1900 = vmatpush.msra.mxu0 0.0
        %1901 = vmatpush.msra.mxu0 %v405
        %1902 = vmatpush.msra.mxu0 %v404
        %1903 = vmatpush.msra.mxu0 %v403
        %1904 = vmatpush.msra.mxu0 %v402
        %1905 = vmatmul.f32.gmra.mxu0 %v1884
        %v1906 = vpop.f32.mrf.mxu0
        %v1907 = vadd.f32 %v1882, %v1906
        %1908 = vmatmul.f32.gmra.mxu0 %v1887
        %v1909 = vpop.f32.mrf.mxu0
        %v1910 = vadd.f32 %v1882, %v1909
        %1911 = vdwg.mxu0
        %v1912 = vmax.f32 %v1907, 0.0
        %v1913 = vmax.f32 %v1910, 0.0
        %v1914 = vperm.slane %v415, 0
        %vm1915 = vcmask 523264
        %v1917 = vsel %vm1915, %v1912, 0
        %v1920 = vsel %vm1915, %v1913, 0
        %1922 = vmatpush.msra.mxu0 0.0
        %1923 = vmatpush.msra.mxu0 0.0
        %1924 = vmatpush.msra.mxu0 0.0
        %1925 = vmatpush.msra.mxu0 0.0
        %1926 = vmatpush.msra.mxu0 0.0
        %1927 = vmatpush.msra.mxu0 0.0
        %1928 = vmatpush.msra.mxu0 0.0
        %1929 = vmatpush.msra.mxu0 0.0
        %1930 = vmatpush.msra.mxu0 %v414
        %1931 = vmatpush.msra.mxu0 %v413
        %1932 = vmatpush.msra.mxu0 %v412
        %1933 = vmatpush.msra.mxu0 %v411
        %1934 = vmatpush.msra.mxu0 %v410
        %1935 = vmatpush.msra.mxu0 %v409
        %1936 = vmatpush.msra.mxu0 %v408
        %1937 = vmatpush.msra.mxu0 %v407
        %1938 = vmatmul.f32.gmra.mxu0 %v1917
        %v1939 = vpop.f32.mrf.mxu0
        %v1940 = vadd.f32 %v1914, %v1939
        %1941 = vmatmul.f32.gmra.mxu0 %v1920
        %v1942 = vpop.f32.mrf.mxu0
        %v1943 = vadd.f32 %v1914, %v1942
        %1944 = vdwg.mxu0
        %v1945 = vadd.f32 %v1824, %v1940
        %v1946 = vadd.f32 %v1825, %v1943
        %1947 = vst.msk [vmem:[#allocation2] sm:$0xff] %vm416, %v1945
        %1948 = vst.msk [vmem:[#allocation2 + $0x8] sm:$0xff] %vm416, %v1946
        %p1949 = scmp.eq.s32.totalorder %s21, 1
        // Predicated region
        $region61: #{tpu_custom_call.1} parent=55 // pred_check
          %p1950 = pneg %p1949
        $region62: #{tpu_custom_call.1} parent=55 // pred_check_branch
          %1952 = sbr.rel (%p1950) target = $region64
        $region63: #{tpu_custom_call.1} parent=55 // pred_region
          %v1953 = vld [vmem:[%s8] sm:$0x3]
          %v1954 = vsel %vm416, %v1945, 0.0
          %1955 = vadd.xlane.f32.xlu0 %v1954
          %v1956 = vpop.xlane.xlu0 %1955
          %v1957 = vsel %vm416, %v1946, 0.0
          %1958 = vadd.xlane.f32.xlu0 %v1957
          %v1959 = vpop.xlane.xlu0 %1958
          %v1960 = vmul.f32 %v1956, %v429
          %v1961 = vmul.f32 %v1959, %v429
          %v1962 = vsub.f32 %v1945, %v1960
          %v1963 = vsub.f32 %v1946, %v1961
          %v1964 = vmul.f32 %v1962, %v1962
          %v1965 = vmul.f32 %v1963, %v1963
          %v1966 = vsel %vm416, %v1964, 0.0
          %1967 = vadd.xlane.f32.xlu0 %v1966
          %v1968 = vpop.xlane.xlu0 %1967
          %v1969 = vsel %vm416, %v1965, 0.0
          %1970 = vadd.xlane.f32.xlu0 %v1969
          %v1971 = vpop.xlane.xlu0 %1970
          %v1972 = vmul.f32 %v1968, 0.032258064
          %v1973 = vmul.f32 %v1971, 0.032258064
          %v1974 = vrsqrt.pop %v1972
          %v1975 = vmul.f32 %v1974, %v1972
          %v1976 = vmul.f32 %v1975, %v1974
          %v1977 = vmul.f32 0.5, %v1976
          %v1978 = vsub.f32 1.5, %v1977
          %v1979 = vmul.f32 %v1974, %v1978
          %v1980 = vmul.f32 %v1972, %v1979
          %vm1981 = vcmp.eq.f32.partialorder %v1972, inf
          %v1982 = vsel %vm1981, %v1972, %v1980
          %vm1983 = vcmp.eq.f32.partialorder %v1972, 0.0
          %v1984 = vand.u32 %v1972, 2147483648
          %v1985 = vsel %vm1983, %v1984, %v1982
          %v1986 = vrsqrt.pop %v1973
          %v1987 = vmul.f32 %v1986, %v1973
          %v1988 = vmul.f32 %v1987, %v1986
          %v1989 = vmul.f32 0.5, %v1988
          %v1990 = vsub.f32 1.5, %v1989
          %v1991 = vmul.f32 %v1986, %v1990
          %v1992 = vmul.f32 %v1973, %v1991
          %vm1993 = vcmp.eq.f32.partialorder %v1973, inf
          %v1994 = vsel %vm1993, %v1973, %v1992
          %vm1995 = vcmp.eq.f32.partialorder %v1973, 0.0
          %v1996 = vand.u32 %v1973, 2147483648
          %v1997 = vsel %vm1995, %v1996, %v1994
          %v1998 = vadd.f32 %v1985, 1e-06
          %v1999 = vadd.f32 %v1997, 1e-06
          %v2000 = vrcp.pop %v1998
          %v2001 = vrcp.pop %v1999
          %v2002 = vperm.slane %v1953, 0
          %v2003 = vmul.f32 %v2002, %v1962
          %v2004 = vmul.f32 %v2002, %v1963
          %v2005 = vmul.f32 %v2003, %v2000
          %v2006 = vmul.f32 %v2004, %v2001
          %v2007 = vperm.slane %v1953, 1
          %v2008 = vadd.f32 %v2005, %v2007
          %v2009 = vadd.f32 %v2006, %v2007
          %2010 = vst.msk [vmem:[#allocation2] sm:$0xff] %vm416, %v2008
          %2011 = vst.msk [vmem:[#allocation2 + $0x8] sm:$0xff] %vm416, %v2009
        $region64: #{tpu_custom_call.1} parent=55 // pred_fallthru
          _
        // Predicated region
        $region65: #{tpu_custom_call.1} parent=55 // pred_check
          %p2012 = pneg %p243
        $region66: #{tpu_custom_call.1} parent=55 // pred_check_branch
          %2014 = sbr.rel (%p2012) target = $region68
        $region67: #{tpu_custom_call.1} parent=55 // pred_region
          %2016 = vsyncadd [#allocation3], 0
          %s2017 = sshll.u32 [#allocation2], 4
          %s2018 = int_to_ptr.vmem [resolvable:$true] %s2017
          %s2019 = sshll.u32 %s9, 4
          %s2020 = int_to_ptr.hbm [resolvable:$true] %s2019
          %2025 = dma.vmem_to_hbm [thread:$0]  %s2018, 256, %s2020, [#allocation3], 128, 128, 8
        $region68: #{tpu_custom_call.1} parent=55 // pred_fallthru
          _
        // Predicated region
        $region69: #{tpu_custom_call.1} parent=55 // pred_check
          %p2026 = pneg %p243
        $region70: #{tpu_custom_call.1} parent=55 // pred_check_branch
          %2028 = sbr.rel (%p2026) target = $region72
        $region71: #{tpu_custom_call.1} parent=55 // pred_region
          %2030 = dma.done [#allocation3], 256
        $region72: #{tpu_custom_call.1} parent=55 // pred_fallthru
          _
      $region56: #{tpu_custom_call.1} parent=5 // pred_fallthru
        _
      %p2031 = scmp.le.s32.totalorder 2, %s16
      // Predicated region
      $region73: #{tpu_custom_call.1} parent=5 // pred_check
        %p2032 = pneg %p2031
      $region74: #{tpu_custom_call.1} parent=5 // pred_check_branch
        %2034 = sbr.rel (%p2032) target = $region76
      $region75: #{tpu_custom_call.1} parent=5 // pred_region
        %s2035 = ssub.s32 %s16, 2
      $region76: #{tpu_custom_call.1} parent=5 // pred_fallthru
        _
    $region6: #{tpu_custom_call.1} parent=1 // loop_footer
      %s20 = sadd.s32 1, %s16
    $region7: #{tpu_custom_call.1} parent=1 // loop_footer_branch
      %15 = sbr.rel target = $region3
    $region8: #{tpu_custom_call.1} parent=1 // loop_exit
      _
    %2036 = vsyncpa [#allocation3], 1
    %s2037 = scalar_lea.sflag [#allocation3], 1
    %2038 = vsyncpa %s2037, 1

</llo_original>
